<compile_context>
chip_gen: v7x
topology: tpu7x:2x2x1
jax: 0.10.0
libtpu: 0.0.40
codegen_flags: <defaults>
</compile_context>

<pallas_src>
import jax
import jax.numpy as jnp
from jax.experimental import pallas as pl
from jax.experimental.pallas import tpu as pltpu

BN_EPS = 1e-5       # nn.BatchNorm1d default eps
GEN_EPS = 1e-7      # GENConv eps
BETA = 1.0          # GENConv inverse temperature (learn_beta=False)
NEG_BIG = -1e30     # only used by the pure-JAX reference (per-node segment max)


# ----------------------------------------------------------------------------- fused kernel
def _fused_kernel(ef_ref, dsrc_ref, ddst_ref, dsc_ref,
                  wn_ref, bn_ref, we0_ref, be0_ref,
                  gamma_ref, betab_ref, wel_ref, bel_ref, wml_ref, bml_ref,
                  wout_ref, bout_ref,
                  out_ref,
                  hv_ref, he_ref):
    layer = pl.program_id(0)

    # bf16 one-hot incidence matrices (exact 0/1), upcast once per grid step.
    dsrc = dsrc_ref[...].astype(jnp.float32)   # [E, N]
    ddst = ddst_ref[...].astype(jnp.float32)   # [E, N]
    dsc = dsc_ref[...].astype(jnp.float32)     # [N, E]

    # ---- encoder: runs only at layer 0; hv / he then live in VMEM scratch.
    @pl.when(layer == 0)
    def _():
        ef = ef_ref[...]
        # g.update_all(copy_e, sum): per-node sum of incoming edge feats
        node_sum = jnp.dot(dsc, ef, preferred_element_type=jnp.float32)
        hv_ref[...] = jnp.dot(node_sum, wn_ref[...],
                              preferred_element_type=jnp.float32) + bn_ref[...]
        he_ref[...] = jnp.dot(ef, we0_ref[...],
                              preferred_element_type=jnp.float32) + be0_ref[...]

    hv = hv_ref[...]

    # --- norm('batch') = BatchNorm1d (training-mode batch stats, biased var) + ReLU
    mean = jnp.mean(hv, axis=0, keepdims=True)
    var = jnp.mean((hv - mean) ** 2, axis=0, keepdims=True)
    hv1 = (hv - mean) * jax.lax.rsqrt(var + BN_EPS) * gamma_ref[0] + betab_ref[0]
    hv1 = jnp.maximum(hv1, 0.0)
    # F.dropout(p=0.0) is the identity

    # --- GENConv(aggregator='softmax', beta=1.0, mlp_layers=1, msg_norm=None)
    he_l = jnp.dot(he_ref[...], wel_ref[0],
                   preferred_element_type=jnp.float32) + bel_ref[0]
    m = jnp.dot(dsrc, hv1, preferred_element_type=jnp.float32) + he_l   # fn.u_add_e
    m = jnp.maximum(m, 0.0) + GEN_EPS
    z = m * BETA

    # edge_softmax over incoming edges of each destination node, per feature.
    # Shift-invariance => a per-feature global max is an identical stabilizer and
    # avoids the [N, E, H] masked broadcast / segment-max entirely.
    numer = jnp.exp(z - jnp.max(z, axis=0, keepdims=True))                # [E, H]
    denom = jnp.dot(dsc, numer, preferred_element_type=jnp.float32)       # [N, H] segment sum
    denom_e = jnp.dot(ddst, denom, preferred_element_type=jnp.float32)    # gather to edges
    a = numer * pl.reciprocal(denom_e, approx=True)

    # update_all(m * a, sum), residual with pre-MLP feats, MLP = single Linear
    agg = jnp.dot(dsc, m * a, preferred_element_type=jnp.float32)
    conv = jnp.dot(hv1 + agg, wml_ref[0],
                   preferred_element_type=jnp.float32) + bml_ref[0]
    hv_new = conv + hv                         # DeeperGCN residual: hv = conv(hv1) + hv
    hv_ref[...] = hv_new

    # ---- readout fused into the last layer: AvgPooling over nodes + output Linear
    @pl.when(layer == pl.num_programs(0) - 1)
    def _():
        hg = jnp.mean(hv_new, axis=0, keepdims=True)
        out_ref[...] = jnp.dot(hg, wout_ref[...],
                               preferred_element_type=jnp.float32) + bout_ref[...]


# ----------------------------------------------------------------------------- pallas_call glue
def _const_spec(shape):
    zeros = (0,) * len(shape)
    return pl.BlockSpec(tuple(shape), lambda l: zeros)


def _layer_spec(tail):
    zeros = (0,) * len(tail)
    return pl.BlockSpec((1,) + tuple(tail), lambda l: (l,) + zeros)


def deeper_gcn_forward(edge_feats, dsrc, ddst, dsc, params):
    wn, bn = params["node_enc"]
    we0, be0 = params["edge_enc"]
    wout, bout = params["output"]
    layers = params["layers"]
    num_layers = len(layers)

    n, e = dsc.shape
    f = edge_feats.shape[1]
    hid = wn.shape[1]
    out_dim = wout.shape[1]

    # stack per-layer params so one BlockSpec index_map selects layer `l`
    gamma = jnp.stack([lp["gamma"] for lp in layers])   # [L, 1, H]
    betab = jnp.stack([lp["beta"] for lp in layers])    # [L, 1, H]
    wel = jnp.stack([lp["We"] for lp in layers])        # [L, H, H]
    bel = jnp.stack([lp["be"] for lp in layers])        # [L, 1, H]
    wml = jnp.stack([lp["Wm"] for lp in layers])        # [L, H, H]
    bml = jnp.stack([lp["bm"] for lp in layers])        # [L, 1, H]

    # one-hot incidence matrices are exact in bf16
    dsrc16 = dsrc.astype(jnp.bfloat16)
    ddst16 = ddst.astype(jnp.bfloat16)
    dsc16 = dsc.astype(jnp.bfloat16)

    in_specs = [
        _const_spec((e, f)),                     # ef
        _const_spec((e, n)),                     # dsrc
        _const_spec((e, n)),                     # ddst
        _const_spec((n, e)),                     # dsc
        _const_spec((f, hid)),                   # wn
        _const_spec((1, hid)),                   # bn
        _const_spec((f, hid)),                   # we0
        _const_spec((1, hid)),                   # be0
        _layer_spec((1, hid)),                   # gamma
        _layer_spec((1, hid)),                   # beta
        _layer_spec((hid, hid)),                 # We (per-layer edge encoder)
        _layer_spec((1, hid)),                   # be
        _layer_spec((hid, hid)),                 # Wm (GENConv MLP)
        _layer_spec((1, hid)),                   # bm
        _const_spec((hid, out_dim)),             # wout
        _const_spec((1, out_dim)),               # bout
    ]

    grid_spec = pltpu.PrefetchScalarGridSpec(
        num_scalar_prefetch=0,
        grid=(num_layers,),
        in_specs=in_specs,
        out_specs=pl.BlockSpec((1, out_dim), lambda l: (0, 0)),
        scratch_shapes=[pltpu.VMEM((n, hid), jnp.float32),    # hv
                        pltpu.VMEM((e, hid), jnp.float32)],   # he
    )

    return pl.pallas_call(
        _fused_kernel,
        grid_spec=grid_spec,
        out_shape=jax.ShapeDtypeStruct((1, out_dim), jnp.float32),
        compiler_params=pltpu.CompilerParams(
            dimension_semantics=("arbitrary",),
            vmem_limit_bytes=32 * 1024 * 1024,
        ),
    )(edge_feats, dsrc16, ddst16, dsc16, wn, bn, we0, be0,
      gamma, betab, wel, bel, wml, bml, wout, bout)


# ----------------------------------------------------------------------------- params / reference
def _linear_params(key, in_dim, out_dim):
    k1, k2 = jax.random.split(key)
    bound = 1.0 / (in_dim ** 0.5)
    w = jax.random.uniform(k1, (in_dim, out_dim), jnp.float32, -bound, bound)
    b = jax.random.uniform(k2, (1, out_dim), jnp.float32, -bound, bound)
    return w, b


def init_params(key, node_feat_dim, edge_feat_dim, hid_dim, out_dim, num_layers):
    keys = jax.random.split(key, num_layers + 3)
    params = {
        "node_enc": _linear_params(keys[0], node_feat_dim, hid_dim),
        "edge_enc": _linear_params(keys[1], edge_feat_dim, hid_dim),
        "layers": [],
        "output": _linear_params(keys[-1], hid_dim, out_dim),
    }
    for i in range(num_layers):
        k1, k2 = jax.random.split(keys[2 + i])
        we, be = _linear_params(k1, hid_dim, hid_dim)   # GENConv.edge_encoder (ogbg-ppa)
        wm, bm = _linear_params(k2, hid_dim, hid_dim)   # GENConv.mlp (mlp_layers=1 -> Linear)
        params["layers"].append({
            "gamma": jnp.ones((1, hid_dim), jnp.float32),   # BatchNorm1d weight
            "beta": jnp.zeros((1, hid_dim), jnp.float32),   # BatchNorm1d bias
            "We": we, "be": be, "Wm": wm, "bm": bm,
        })
    return params


def reference_forward(edge_feats, dsrc, ddst, dsc, params):
    """Pure-JAX mirror of the PyTorch forward (per-dst-node edge_softmax, exact div)."""
    wn, bn = params["node_enc"]
    we0, be0 = params["edge_enc"]
    hv = (dsc @ edge_feats) @ wn + bn
    he = edge_feats @ we0 + be0
    for lp in params["layers"]:
        mean = hv.mean(axis=0, keepdims=True)
        var = ((hv - mean) ** 2).mean(axis=0, keepdims=True)
        hv1 = (hv - mean) / jnp.sqrt(var + BN_EPS) * lp["gamma"] + lp["beta"]
        hv1 = jnp.maximum(hv1, 0.0)
        he_l = he @ lp["We"] + lp["be"]
        m = jnp.maximum(dsrc @ hv1 + he_l, 0.0) + GEN_EPS
        z = m * BETA
        maxz = jnp.max(jnp.where((dsc > 0.5)[:, :, None], z[None, :, :], NEG_BIG), axis=1)
        numer = jnp.exp(z - ddst @ maxz)
        a = numer / (ddst @ (dsc @ numer))
        hv = (hv1 + dsc @ (m * a)) @ lp["Wm"] + lp["bm"] + hv
    hg = hv.mean(axis=0, keepdims=True)
    wout, bout = params["output"]
    return hg @ wout + bout


# ----------------------------------------------------------------------------- main
if __name__ == "__main__":
    N_NODES, N_EDGES = 8, 16
    NODE_FEAT_DIM = EDGE_FEAT_DIM = 8
    HID_DIM, OUT_DIM, NUM_LAYERS = 128, 16, 3   # H padded to 128 lanes (MXU/lane density)

    root = jax.random.PRNGKey(0)
    k_param, k_src, k_dst, k_ef = jax.random.split(root, 4)

    # synthetic graph (ogbg-ppa style: only edge features are used as input)
    src = jax.random.randint(k_src, (N_EDGES,), 0, N_NODES)
    dst = jax.random.randint(k_dst, (N_EDGES,), 0, N_NODES)
    dsrc = jax.nn.one_hot(src, N_NODES, dtype=jnp.float32)   # [E, N]
    ddst = jax.nn.one_hot(dst, N_NODES, dtype=jnp.float32)   # [E, N]
    dsc = ddst.T                                             # [N, E]
    edge_feats = jax.random.normal(k_ef, (N_EDGES, EDGE_FEAT_DIM), jnp.float32)

    params = init_params(k_param, NODE_FEAT_DIM, EDGE_FEAT_DIM,
                         HID_DIM, OUT_DIM, NUM_LAYERS)

    out = jax.jit(deeper_gcn_forward)(edge_feats, dsrc, ddst, dsc, params)
    out = jax.block_until_ready(out)

    ref = reference_forward(edge_feats, dsrc, ddst, dsc, params)
    if not jnp.allclose(out, ref, rtol=5e-3, atol=5e-3):
        raise AssertionError(f"mismatch vs reference: {out} vs {ref}")

    assert out.shape == (1, OUT_DIM)
    print("KERNEL_OK")
</pallas_src>

<mosaic_0001>
module attributes {stable_mosaic.version = 11 : i64} {
  func.func @_fused_kernel(%arg0: i32, %arg1: memref<16x8xf32, #tpu.memory_space<vmem>>, %arg2: memref<16x8xbf16, #tpu.memory_space<vmem>>, %arg3: memref<16x8xbf16, #tpu.memory_space<vmem>>, %arg4: memref<8x16xbf16, #tpu.memory_space<vmem>>, %arg5: memref<8x128xf32, #tpu.memory_space<vmem>>, %arg6: memref<1x128xf32, #tpu.memory_space<vmem>>, %arg7: memref<8x128xf32, #tpu.memory_space<vmem>>, %arg8: memref<1x128xf32, #tpu.memory_space<vmem>>, %arg9: memref<1x1x128xf32, #tpu.memory_space<vmem>>, %arg10: memref<1x1x128xf32, #tpu.memory_space<vmem>>, %arg11: memref<1x128x128xf32, #tpu.memory_space<vmem>>, %arg12: memref<1x1x128xf32, #tpu.memory_space<vmem>>, %arg13: memref<1x128x128xf32, #tpu.memory_space<vmem>>, %arg14: memref<1x1x128xf32, #tpu.memory_space<vmem>>, %arg15: memref<128x16xf32, #tpu.memory_space<vmem>>, %arg16: memref<1x16xf32, #tpu.memory_space<vmem>>, %arg17: memref<1x16xf32, #tpu.memory_space<vmem>>, %arg18: memref<8x128xf32, #tpu.memory_space<vmem>>, %arg19: memref<16x128xf32, #tpu.memory_space<vmem>>) attributes {dimension_semantics = [#tpu.dimension_semantics<arbitrary>], iteration_bounds = array<i64: 3>, scalar_prefetch = 0 : i64, scratch_operands = 2 : i64, tpu.core_type = #tpu.core_type<tc>, window_params = [{pipeline_mode = #tpu.pipeline_mode<synchronous>, transform_indices = @transform_0, window_bounds = array<i64: 16, 8>}, {pipeline_mode = #tpu.pipeline_mode<synchronous>, transform_indices = @transform_1, window_bounds = array<i64: 16, 8>}, {pipeline_mode = #tpu.pipeline_mode<synchronous>, transform_indices = @transform_2, window_bounds = array<i64: 16, 8>}, {pipeline_mode = #tpu.pipeline_mode<synchronous>, transform_indices = @transform_3, window_bounds = array<i64: 8, 16>}, {pipeline_mode = #tpu.pipeline_mode<synchronous>, transform_indices = @transform_4, window_bounds = array<i64: 8, 128>}, {pipeline_mode = #tpu.pipeline_mode<synchronous>, transform_indices = @transform_5, window_bounds = array<i64: 1, 128>}, {pipeline_mode = #tpu.pipeline_mode<synchronous>, transform_indices = @transform_6, window_bounds = array<i64: 8, 128>}, {pipeline_mode = #tpu.pipeline_mode<synchronous>, transform_indices = @transform_7, window_bounds = array<i64: 1, 128>}, {transform_indices = @transform_8, window_bounds = array<i64: 1, 1, 128>}, {transform_indices = @transform_9, window_bounds = array<i64: 1, 1, 128>}, {transform_indices = @transform_10, window_bounds = array<i64: 1, 128, 128>}, {transform_indices = @transform_11, window_bounds = array<i64: 1, 1, 128>}, {transform_indices = @transform_12, window_bounds = array<i64: 1, 128, 128>}, {transform_indices = @transform_13, window_bounds = array<i64: 1, 1, 128>}, {pipeline_mode = #tpu.pipeline_mode<synchronous>, transform_indices = @transform_14, window_bounds = array<i64: 128, 16>}, {pipeline_mode = #tpu.pipeline_mode<synchronous>, transform_indices = @transform_15, window_bounds = array<i64: 1, 16>}, {pipeline_mode = #tpu.pipeline_mode<synchronous>, transform_indices = @transform_16, window_bounds = array<i64: 1, 16>}]} {
    %c0 = arith.constant 0 : index
    %c0_0 = arith.constant 0 : index
    %0 = vector.load %arg2[%c0, %c0_0] : memref<16x8xbf16, #tpu.memory_space<vmem>>, vector<16x8xbf16>
    %1 = arith.extf %0 : vector<16x8xbf16> to vector<16x8xf32>
    %c0_1 = arith.constant 0 : index
    %c0_2 = arith.constant 0 : index
    %2 = vector.load %arg3[%c0_1, %c0_2] : memref<16x8xbf16, #tpu.memory_space<vmem>>, vector<16x8xbf16>
    %3 = arith.extf %2 : vector<16x8xbf16> to vector<16x8xf32>
    %c0_3 = arith.constant 0 : index
    %c0_4 = arith.constant 0 : index
    %4 = vector.load %arg4[%c0_3, %c0_4] : memref<8x16xbf16, #tpu.memory_space<vmem>>, vector<8x16xbf16>
    %5 = arith.extf %4 : vector<8x16xbf16> to vector<8x16xf32>
    %c0_i32 = arith.constant 0 : i32
    %6 = arith.cmpi eq, %arg0, %c0_i32 : i32
    %7 = arith.extui %6 : i1 to i32
    %c0_i32_5 = arith.constant 0 : i32
    %8 = arith.cmpi ne, %7, %c0_i32_5 : i32
    scf.if %8 {
      %c0_46 = arith.constant 0 : index
      %c0_47 = arith.constant 0 : index
      %78 = vector.load %arg1[%c0_46, %c0_47] : memref<16x8xf32, #tpu.memory_space<vmem>>, vector<16x8xf32>
      %cst_48 = arith.constant dense<0.000000e+00> : vector<8x8xf32>
      %79 = tpu.matmul %5, %78, %cst_48 {dimension_numbers = #tpu.dot_dimension_numbers<[1], [0], [0], [1], [0, 0, 1, 1], [], []>} : vector<8x16xf32>, vector<16x8xf32>, vector<8x8xf32> -> vector<8x8xf32>
      %c0_49 = arith.constant 0 : index
      %c0_50 = arith.constant 0 : index
      %80 = vector.load %arg5[%c0_49, %c0_50] : memref<8x128xf32, #tpu.memory_space<vmem>>, vector<8x128xf32>
      %cst_51 = arith.constant dense<0.000000e+00> : vector<8x128xf32>
      %81 = tpu.matmul %79, %80, %cst_51 {dimension_numbers = #tpu.dot_dimension_numbers<[1], [0], [0], [1], [0, 0, 1, 1], [], []>} : vector<8x8xf32>, vector<8x128xf32>, vector<8x128xf32> -> vector<8x128xf32>
      %c0_52 = arith.constant 0 : index
      %c0_53 = arith.constant 0 : index
      %82 = vector.load %arg6[%c0_52, %c0_53] : memref<1x128xf32, #tpu.memory_space<vmem>>, vector<1x128xf32>
      %83 = vector.broadcast %82 : vector<1x128xf32> to vector<8x128xf32>
      %84 = arith.addf %81, %83 : vector<8x128xf32>
      %c0_54 = arith.constant 0 : index
      %c0_55 = arith.constant 0 : index
      %85 = vector.load %arg18[%c0_54, %c0_55] : memref<8x128xf32, #tpu.memory_space<vmem>>, vector<8x128xf32>
      tpu.vector_store %arg18[%c0_54, %c0_55], %84 {strides = array<i32>} : memref<8x128xf32, #tpu.memory_space<vmem>>, vector<8x128xf32>,
      %c0_56 = arith.constant 0 : index
      %c0_57 = arith.constant 0 : index
      %86 = vector.load %arg7[%c0_56, %c0_57] : memref<8x128xf32, #tpu.memory_space<vmem>>, vector<8x128xf32>
      %cst_58 = arith.constant dense<0.000000e+00> : vector<16x128xf32>
      %87 = tpu.matmul %78, %86, %cst_58 {dimension_numbers = #tpu.dot_dimension_numbers<[1], [0], [0], [1], [0, 0, 1, 1], [], []>} : vector<16x8xf32>, vector<8x128xf32>, vector<16x128xf32> -> vector<16x128xf32>
      %c0_59 = arith.constant 0 : index
      %c0_60 = arith.constant 0 : index
      %88 = vector.load %arg8[%c0_59, %c0_60] : memref<1x128xf32, #tpu.memory_space<vmem>>, vector<1x128xf32>
      %89 = vector.broadcast %88 : vector<1x128xf32> to vector<16x128xf32>
      %90 = arith.addf %87, %89 : vector<16x128xf32>
      %c0_61 = arith.constant 0 : index
      %c0_62 = arith.constant 0 : index
      %91 = vector.load %arg19[%c0_61, %c0_62] : memref<16x128xf32, #tpu.memory_space<vmem>>, vector<16x128xf32>
      tpu.vector_store %arg19[%c0_61, %c0_62], %90 {strides = array<i32>} : memref<16x128xf32, #tpu.memory_space<vmem>>, vector<16x128xf32>,
    } else {
    }
    %c0_6 = arith.constant 0 : index
    %c0_7 = arith.constant 0 : index
    %9 = vector.load %arg18[%c0_6, %c0_7] : memref<8x128xf32, #tpu.memory_space<vmem>>, vector<8x128xf32>
    %cst = arith.constant dense<0.000000e+00> : vector<128xf32>
    %10 = vector.multi_reduction <add>, %9, %cst [0] : vector<8x128xf32> to vector<128xf32>
    %11 = vector.shape_cast %10 : vector<128xf32> to vector<1x128xf32>
    %cst_8 = arith.constant 8.000000e+00 : f32
    %12 = vector.broadcast %cst_8 : f32 to vector<1x128xf32>
    %13 = arith.divf %11, %12 : vector<1x128xf32>
    %14 = vector.broadcast %13 : vector<1x128xf32> to vector<8x128xf32>
    %15 = arith.subf %9, %14 : vector<8x128xf32>
    %16 = arith.mulf %15, %15 : vector<8x128xf32>
    %cst_9 = arith.constant dense<0.000000e+00> : vector<128xf32>
    %17 = vector.multi_reduction <add>, %16, %cst_9 [0] : vector<8x128xf32> to vector<128xf32>
    %18 = vector.shape_cast %17 : vector<128xf32> to vector<1x128xf32>
    %cst_10 = arith.constant 8.000000e+00 : f32
    %19 = vector.broadcast %cst_10 : f32 to vector<1x128xf32>
    %20 = arith.divf %18, %19 : vector<1x128xf32>
    %21 = vector.broadcast %13 : vector<1x128xf32> to vector<8x128xf32>
    %22 = arith.subf %9, %21 : vector<8x128xf32>
    %cst_11 = arith.constant 9.99999974E-6 : f32
    %23 = vector.broadcast %cst_11 : f32 to vector<1x128xf32>
    %24 = arith.addf %20, %23 : vector<1x128xf32>
    %25 = math.rsqrt %24 : vector<1x128xf32>
    %26 = vector.broadcast %25 : vector<1x128xf32> to vector<8x128xf32>
    %27 = arith.mulf %22, %26 : vector<8x128xf32>
    %c0_12 = arith.constant 0 : index
    %c0_13 = arith.constant 0 : index
    %c0_14 = arith.constant 0 : index
    %28 = vector.load %arg9[%c0_12, %c0_13, %c0_14] : memref<1x1x128xf32, #tpu.memory_space<vmem>>, vector<1x1x128xf32>
    %29 = vector.shape_cast %28 : vector<1x1x128xf32> to vector<1x128xf32>
    %30 = vector.broadcast %29 : vector<1x128xf32> to vector<8x128xf32>
    %31 = arith.mulf %27, %30 : vector<8x128xf32>
    %c0_15 = arith.constant 0 : index
    %c0_16 = arith.constant 0 : index
    %c0_17 = arith.constant 0 : index
    %32 = vector.load %arg10[%c0_15, %c0_16, %c0_17] : memref<1x1x128xf32, #tpu.memory_space<vmem>>, vector<1x1x128xf32>
    %33 = vector.shape_cast %32 : vector<1x1x128xf32> to vector<1x128xf32>
    %34 = vector.broadcast %33 : vector<1x128xf32> to vector<8x128xf32>
    %35 = arith.addf %31, %34 : vector<8x128xf32>
    %cst_18 = arith.constant 0.000000e+00 : f32
    %36 = vector.broadcast %cst_18 : f32 to vector<8x128xf32>
    %37 = arith.maximumf %35, %36 : vector<8x128xf32>
    %c0_19 = arith.constant 0 : index
    %c0_20 = arith.constant 0 : index
    %38 = vector.load %arg19[%c0_19, %c0_20] : memref<16x128xf32, #tpu.memory_space<vmem>>, vector<16x128xf32>
    %c0_21 = arith.constant 0 : index
    %c0_22 = arith.constant 0 : index
    %c0_23 = arith.constant 0 : index
    %39 = vector.load %arg11[%c0_21, %c0_22, %c0_23] : memref<1x128x128xf32, #tpu.memory_space<vmem>>, vector<1x128x128xf32>
    %40 = vector.shape_cast %39 : vector<1x128x128xf32> to vector<128x128xf32>
    %cst_24 = arith.constant dense<0.000000e+00> : vector<16x128xf32>
    %41 = tpu.matmul %38, %40, %cst_24 {dimension_numbers = #tpu.dot_dimension_numbers<[1], [0], [0], [1], [0, 0, 1, 1], [], []>} : vector<16x128xf32>, vector<128x128xf32>, vector<16x128xf32> -> vector<16x128xf32>
    %c0_25 = arith.constant 0 : index
    %c0_26 = arith.constant 0 : index
    %c0_27 = arith.constant 0 : index
    %42 = vector.load %arg12[%c0_25, %c0_26, %c0_27] : memref<1x1x128xf32, #tpu.memory_space<vmem>>, vector<1x1x128xf32>
    %43 = vector.shape_cast %42 : vector<1x1x128xf32> to vector<1x128xf32>
    %44 = vector.broadcast %43 : vector<1x128xf32> to vector<16x128xf32>
    %45 = arith.addf %41, %44 : vector<16x128xf32>
    %cst_28 = arith.constant dense<0.000000e+00> : vector<16x128xf32>
    %46 = tpu.matmul %1, %37, %cst_28 {dimension_numbers = #tpu.dot_dimension_numbers<[1], [0], [0], [1], [0, 0, 1, 1], [], []>} : vector<16x8xf32>, vector<8x128xf32>, vector<16x128xf32> -> vector<16x128xf32>
    %47 = arith.addf %46, %45 : vector<16x128xf32>
    %cst_29 = arith.constant 0.000000e+00 : f32
    %48 = vector.broadcast %cst_29 : f32 to vector<16x128xf32>
    %49 = arith.maximumf %47, %48 : vector<16x128xf32>
    %cst_30 = arith.constant 1.000000e-07 : f32
    %50 = vector.broadcast %cst_30 : f32 to vector<16x128xf32>
    %51 = arith.addf %49, %50 : vector<16x128xf32>
    %cst_31 = arith.constant 1.000000e+00 : f32
    %52 = vector.broadcast %cst_31 : f32 to vector<16x128xf32>
    %53 = arith.mulf %51, %52 : vector<16x128xf32>
    %cst_32 = arith.constant dense<0xFF800000> : vector<128xf32>
    %54 = vector.multi_reduction <maximumf>, %53, %cst_32 [0] : vector<16x128xf32> to vector<128xf32>
    %55 = vector.shape_cast %54 : vector<128xf32> to vector<1x128xf32>
    %56 = vector.broadcast %55 : vector<1x128xf32> to vector<16x128xf32>
    %57 = arith.subf %53, %56 : vector<16x128xf32>
    %58 = math.exp %57 : vector<16x128xf32>
    %cst_33 = arith.constant dense<0.000000e+00> : vector<8x128xf32>
    %59 = tpu.matmul %5, %58, %cst_33 {dimension_numbers = #tpu.dot_dimension_numbers<[1], [0], [0], [1], [0, 0, 1, 1], [], []>} : vector<8x16xf32>, vector<16x128xf32>, vector<8x128xf32> -> vector<8x128xf32>
    %cst_34 = arith.constant dense<0.000000e+00> : vector<16x128xf32>
    %60 = tpu.matmul %3, %59, %cst_34 {dimension_numbers = #tpu.dot_dimension_numbers<[1], [0], [0], [1], [0, 0, 1, 1], [], []>} : vector<16x8xf32>, vector<8x128xf32>, vector<16x128xf32> -> vector<16x128xf32>
    %61 = tpu.reciprocal %60 {approx = true} : vector<16x128xf32> -> vector<16x128xf32>
    %62 = arith.mulf %58, %61 : vector<16x128xf32>
    %63 = arith.mulf %51, %62 : vector<16x128xf32>
    %cst_35 = arith.constant dense<0.000000e+00> : vector<8x128xf32>
    %64 = tpu.matmul %5, %63, %cst_35 {dimension_numbers = #tpu.dot_dimension_numbers<[1], [0], [0], [1], [0, 0, 1, 1], [], []>} : vector<8x16xf32>, vector<16x128xf32>, vector<8x128xf32> -> vector<8x128xf32>
    %65 = arith.addf %37, %64 : vector<8x128xf32>
    %c0_36 = arith.constant 0 : index
    %c0_37 = arith.constant 0 : index
    %c0_38 = arith.constant 0 : index
    %66 = vector.load %arg13[%c0_36, %c0_37, %c0_38] : memref<1x128x128xf32, #tpu.memory_space<vmem>>, vector<1x128x128xf32>
    %67 = vector.shape_cast %66 : vector<1x128x128xf32> to vector<128x128xf32>
    %cst_39 = arith.constant dense<0.000000e+00> : vector<8x128xf32>
    %68 = tpu.matmul %65, %67, %cst_39 {dimension_numbers = #tpu.dot_dimension_numbers<[1], [0], [0], [1], [0, 0, 1, 1], [], []>} : vector<8x128xf32>, vector<128x128xf32>, vector<8x128xf32> -> vector<8x128xf32>
    %c0_40 = arith.constant 0 : index
    %c0_41 = arith.constant 0 : index
    %c0_42 = arith.constant 0 : index
    %69 = vector.load %arg14[%c0_40, %c0_41, %c0_42] : memref<1x1x128xf32, #tpu.memory_space<vmem>>, vector<1x1x128xf32>
    %70 = vector.shape_cast %69 : vector<1x1x128xf32> to vector<1x128xf32>
    %71 = vector.broadcast %70 : vector<1x128xf32> to vector<8x128xf32>
    %72 = arith.addf %68, %71 : vector<8x128xf32>
    %73 = arith.addf %72, %9 : vector<8x128xf32>
    %c0_43 = arith.constant 0 : index
    %c0_44 = arith.constant 0 : index
    %74 = vector.load %arg18[%c0_43, %c0_44] : memref<8x128xf32, #tpu.memory_space<vmem>>, vector<8x128xf32>
    tpu.vector_store %arg18[%c0_43, %c0_44], %73 {strides = array<i32>} : memref<8x128xf32, #tpu.memory_space<vmem>>, vector<8x128xf32>,
    %c2_i32 = arith.constant 2 : i32
    %75 = arith.cmpi eq, %arg0, %c2_i32 : i32
    %76 = arith.extui %75 : i1 to i32
    %c0_i32_45 = arith.constant 0 : i32
    %77 = arith.cmpi ne, %76, %c0_i32_45 : i32
    scf.if %77 {
      %cst_46 = arith.constant dense<0.000000e+00> : vector<128xf32>
      %78 = vector.multi_reduction <add>, %73, %cst_46 [0] : vector<8x128xf32> to vector<128xf32>
      %79 = vector.shape_cast %78 : vector<128xf32> to vector<1x128xf32>
      %cst_47 = arith.constant 8.000000e+00 : f32
      %80 = vector.broadcast %cst_47 : f32 to vector<1x128xf32>
      %81 = arith.divf %79, %80 : vector<1x128xf32>
      %c0_48 = arith.constant 0 : index
      %c0_49 = arith.constant 0 : index
      %82 = vector.load %arg15[%c0_48, %c0_49] : memref<128x16xf32, #tpu.memory_space<vmem>>, vector<128x16xf32>
      %cst_50 = arith.constant dense<0.000000e+00> : vector<1x16xf32>
      %83 = tpu.matmul %81, %82, %cst_50 {dimension_numbers = #tpu.dot_dimension_numbers<[1], [0], [0], [1], [0, 0, 1, 1], [], []>} : vector<1x128xf32>, vector<128x16xf32>, vector<1x16xf32> -> vector<1x16xf32>
      %c0_51 = arith.constant 0 : index
      %c0_52 = arith.constant 0 : index
      %84 = vector.load %arg16[%c0_51, %c0_52] : memref<1x16xf32, #tpu.memory_space<vmem>>, vector<1x16xf32>
      %85 = arith.addf %83, %84 : vector<1x16xf32>
      %c0_53 = arith.constant 0 : index
      %c0_54 = arith.constant 0 : index
      %86 = vector.load %arg17[%c0_53, %c0_54] : memref<1x16xf32, #tpu.memory_space<vmem>>, vector<1x16xf32>
      tpu.vector_store %arg17[%c0_53, %c0_54], %85 {strides = array<i32>} : memref<1x16xf32, #tpu.memory_space<vmem>>, vector<1x16xf32>,
    } else {
    }
    return
  }
  func.func @transform_0(%arg0: i32) -> (i32, i32) {
    %c0_i32 = arith.constant 0 : i32
    %c0_i32_0 = arith.constant 0 : i32
    %c0_i32_1 = arith.constant 0 : i32
    return %c0_i32, %c0_i32_0 : i32, i32
  }
  func.func @transform_1(%arg0: i32) -> (i32, i32) {
    %c0_i32 = arith.constant 0 : i32
    %c0_i32_0 = arith.constant 0 : i32
    %c0_i32_1 = arith.constant 0 : i32
    return %c0_i32, %c0_i32_0 : i32, i32
  }
  func.func @transform_2(%arg0: i32) -> (i32, i32) {
    %c0_i32 = arith.constant 0 : i32
    %c0_i32_0 = arith.constant 0 : i32
    %c0_i32_1 = arith.constant 0 : i32
    return %c0_i32, %c0_i32_0 : i32, i32
  }
  func.func @transform_3(%arg0: i32) -> (i32, i32) {
    %c0_i32 = arith.constant 0 : i32
    %c0_i32_0 = arith.constant 0 : i32
    %c0_i32_1 = arith.constant 0 : i32
    return %c0_i32, %c0_i32_0 : i32, i32
  }
  func.func @transform_4(%arg0: i32) -> (i32, i32) {
    %c0_i32 = arith.constant 0 : i32
    %c0_i32_0 = arith.constant 0 : i32
    %c0_i32_1 = arith.constant 0 : i32
    return %c0_i32, %c0_i32_0 : i32, i32
  }
  func.func @transform_5(%arg0: i32) -> (i32, i32) {
    %c0_i32 = arith.constant 0 : i32
    %c0_i32_0 = arith.constant 0 : i32
    %c0_i32_1 = arith.constant 0 : i32
    return %c0_i32, %c0_i32_0 : i32, i32
  }
  func.func @transform_6(%arg0: i32) -> (i32, i32) {
    %c0_i32 = arith.constant 0 : i32
    %c0_i32_0 = arith.constant 0 : i32
    %c0_i32_1 = arith.constant 0 : i32
    return %c0_i32, %c0_i32_0 : i32, i32
  }
  func.func @transform_7(%arg0: i32) -> (i32, i32) {
    %c0_i32 = arith.constant 0 : i32
    %c0_i32_0 = arith.constant 0 : i32
    %c0_i32_1 = arith.constant 0 : i32
    return %c0_i32, %c0_i32_0 : i32, i32
  }
  func.func @transform_8(%arg0: i32) -> (i32, i32, i32) {
    %c0_i32 = arith.constant 0 : i32
    %c0_i32_0 = arith.constant 0 : i32
    %c0_i32_1 = arith.constant 0 : i32
    return %arg0, %c0_i32, %c0_i32_0 : i32, i32, i32
  }
  func.func @transform_9(%arg0: i32) -> (i32, i32, i32) {
    %c0_i32 = arith.constant 0 : i32
    %c0_i32_0 = arith.constant 0 : i32
    %c0_i32_1 = arith.constant 0 : i32
    return %arg0, %c0_i32, %c0_i32_0 : i32, i32, i32
  }
  func.func @transform_10(%arg0: i32) -> (i32, i32, i32) {
    %c0_i32 = arith.constant 0 : i32
    %c0_i32_0 = arith.constant 0 : i32
    %c0_i32_1 = arith.constant 0 : i32
    return %arg0, %c0_i32, %c0_i32_0 : i32, i32, i32
  }
  func.func @transform_11(%arg0: i32) -> (i32, i32, i32) {
    %c0_i32 = arith.constant 0 : i32
    %c0_i32_0 = arith.constant 0 : i32
    %c0_i32_1 = arith.constant 0 : i32
    return %arg0, %c0_i32, %c0_i32_0 : i32, i32, i32
  }
  func.func @transform_12(%arg0: i32) -> (i32, i32, i32) {
    %c0_i32 = arith.constant 0 : i32
    %c0_i32_0 = arith.constant 0 : i32
    %c0_i32_1 = arith.constant 0 : i32
    return %arg0, %c0_i32, %c0_i32_0 : i32, i32, i32
  }
  func.func @transform_13(%arg0: i32) -> (i32, i32, i32) {
    %c0_i32 = arith.constant 0 : i32
    %c0_i32_0 = arith.constant 0 : i32
    %c0_i32_1 = arith.constant 0 : i32
    return %arg0, %c0_i32, %c0_i32_0 : i32, i32, i32
  }
  func.func @transform_14(%arg0: i32) -> (i32, i32) {
    %c0_i32 = arith.constant 0 : i32
    %c0_i32_0 = arith.constant 0 : i32
    %c0_i32_1 = arith.constant 0 : i32
    return %c0_i32, %c0_i32_0 : i32, i32
  }
  func.func @transform_15(%arg0: i32) -> (i32, i32) {
    %c0_i32 = arith.constant 0 : i32
    %c0_i32_0 = arith.constant 0 : i32
    %c0_i32_1 = arith.constant 0 : i32
    return %c0_i32, %c0_i32_0 : i32, i32
  }
  func.func @transform_16(%arg0: i32) -> (i32, i32) {
    %c0_i32 = arith.constant 0 : i32
    %c0_i32_0 = arith.constant 0 : i32
    %c0_i32_1 = arith.constant 0 : i32
    return %c0_i32, %c0_i32_0 : i32, i32
  }
}

</mosaic_0001>

<llo_original>
// kernel: deeper_gcn_forward.1
$region0: #{deeper_gcn_forward.1}
  #allocation0 [shape = 'u32[]', space=smem, size = 0x4, offset = 0x4, fixed_abs, tag = 'smem constant byte address 0x4 - core index']
  #allocation1 [shape = 'u32[144,128]{1,0:T(1,128)}', space=vmem, size = 0x12000, scoped, tag = 'internal scratch']
  #allocation2 [shape = 'f32[8,128]{1,0:T(8,128)}', space=vmem, size = 0x1000, scoped, tag = 'scratch operand']
  #allocation3 [shape = 'f32[16,128]{1,0:T(8,128)}', space=vmem, size = 0x2000, scoped, tag = 'scratch operand']
  %s0 = inlined_call_operand.vmem [shape: f32[16,8], index: 0, kind: input, shape index: {}]
  %s1 = inlined_call_operand.vmem [shape: bf16[16,8], index: 1, kind: input, shape index: {}]
  %s2 = inlined_call_operand.vmem [shape: bf16[16,8], index: 2, kind: input, shape index: {}]
  %s3 = inlined_call_operand.vmem [shape: bf16[8,16], index: 3, kind: input, shape index: {}]
  %s4 = inlined_call_operand.vmem [shape: f32[8,128], index: 4, kind: input, shape index: {}]
  %s5 = inlined_call_operand.vmem [shape: f32[1,128], index: 5, kind: input, shape index: {}]
  %s6 = inlined_call_operand.vmem [shape: f32[8,128], index: 6, kind: input, shape index: {}]
  %s7 = inlined_call_operand.vmem [shape: f32[1,128], index: 7, kind: input, shape index: {}]
  %s8 = inlined_call_operand.vmem [shape: f32[3,1,128], index: 8, kind: input, shape index: {}]
  %s9 = inlined_call_operand.vmem [shape: f32[3,1,128], index: 9, kind: input, shape index: {}]
  %s10 = inlined_call_operand.vmem [shape: f32[3,128,128], index: 10, kind: input, shape index: {}]
  %s11 = inlined_call_operand.vmem [shape: f32[3,1,128], index: 11, kind: input, shape index: {}]
  %s12 = inlined_call_operand.vmem [shape: f32[3,128,128], index: 12, kind: input, shape index: {}]
  %s13 = inlined_call_operand.vmem [shape: f32[3,1,128], index: 13, kind: input, shape index: {}]
  %s14 = inlined_call_operand.vmem [shape: f32[128,16], index: 14, kind: input, shape index: {}]
  %s15 = inlined_call_operand.vmem [shape: f32[1,16], index: 15, kind: input, shape index: {}]
  %s16 = inlined_call_operand.hbm [shape: f32[1,16], index: 16, kind: output, shape index: {}]
  %s17 = sld [smem:[#allocation0]]
  $region105: #{deeper_gcn_forward.1} parent=0
    _
  %s19 = ssub.s32 1, %s17
  %s20 = scalar_select 0, %s19, %s17
  $region1: #{deeper_gcn_forward.1} parent=0
    #allocation4 [shape = 'u8[512]{0}', space=vmem, size = 0x400, scoped, tag = 'output window, operand 0, single buffered']
    #allocation5 [shape = 's32[2]{0}', space=sflag, size = 0x8, scoped, tag = 'scoped memory for deeper_gcn_forward.1']
    %21 = vsyncpa [#allocation5], 0
    loop: start=0, step=1, limit=5
    $region2: #{deeper_gcn_forward.1} parent=1 // loop_pre_header
      _
    $region3: #{deeper_gcn_forward.1} parent=1 // loop_header
      %s23 = sphi 0, %s27
      %p24 = scmp.ge.s32.totalorder %s23, 5
      %s31 = sphi 0, %s31
      %s33 = sphi 0, %s31
      %s34 = sphi 0, %s33
      %s48 = sphi 0, %s34
      %s52 = sphi 0, %s52
      %s54 = sphi 0, %s52
      %s55 = sphi 0, %s54
      %s69 = sphi 0, %s55
      %s73 = sphi 0, %s73
      %s75 = sphi 0, %s73
      %s76 = sphi 0, %s75
      %s90 = sphi 0, %s76
      %s94 = sphi 0, %s94
      %s96 = sphi 0, %s94
      %s97 = sphi 0, %s96
      %s111 = sphi 0, %s97
      %s115 = sphi 0, %s115
      %s117 = sphi 0, %s115
      %s118 = sphi 0, %s117
      %s132 = sphi 0, %s118
      %s136 = sphi 0, %s136
      %s138 = sphi 0, %s136
      %s139 = sphi 0, %s138
      %s153 = sphi 0, %s139
      %s157 = sphi 0, %s157
      %s159 = sphi 0, %s157
      %s160 = sphi 0, %s159
      %s174 = sphi 0, %s160
      %s178 = sphi 0, %s178
      %s180 = sphi 0, %s178
      %s181 = sphi 0, %s180
      %s195 = sphi 0, %s181
      %s201 = sphi 0, %s203
      %s204 = sphi 0, %s201
      %s205 = sphi 0, %s204
      %s221 = sphi 0, %s205
      %s227 = sphi 0, %s229
      %s230 = sphi 0, %s227
      %s231 = sphi 0, %s230
      %s247 = sphi 0, %s231
      %s253 = sphi 0, %s255
      %s256 = sphi 0, %s253
      %s257 = sphi 0, %s256
      %s273 = sphi 0, %s257
      %s279 = sphi 0, %s281
      %s282 = sphi 0, %s279
      %s283 = sphi 0, %s282
      %s299 = sphi 0, %s283
      %s305 = sphi 0, %s307
      %s308 = sphi 0, %s305
      %s309 = sphi 0, %s308
      %s325 = sphi 0, %s309
      %s331 = sphi 0, %s333
      %s334 = sphi 0, %s331
      %s335 = sphi 0, %s334
      %s351 = sphi 0, %s335
      %s355 = sphi 0, %s355
      %s357 = sphi 0, %s355
      %s358 = sphi 0, %s357
      %s372 = sphi 0, %s358
      %s376 = sphi 0, %s376
      %s378 = sphi 0, %s376
      %s379 = sphi 0, %s378
      %s393 = sphi 0, %s379
      %s397 = sphi 0, %s397
      %s399 = sphi 0, %s397
      %s400 = sphi 0, %s399
      %s414 = sphi 0, %s400
    $region4: #{deeper_gcn_forward.1} parent=1 // loop_header_branch
      %26 = sbr.rel (%p24) target = $region8
    $region5: #{deeper_gcn_forward.1} parent=1 // loop_body
      %s28 = ssub.s32 %s23, 1
      %s29 = ssub.s32 %s23, 2
      %s30 = sadd.s32 %s23, 1
      %s32 = sadd.s32 %s31, 1
      %p35 = scmp.eq.s32.totalorder %s23, 2
      %p36 = scmp.ne.s32.totalorder %s31, %s33
      %p37 = scmp.eq.s32.totalorder %s23, 0
      %p38 = por %p36, %p37
      %p39 = scmp.ne.s32.totalorder %s31, %s33
      %p40 = scmp.eq.s32.totalorder %s28, 2
      %p41 = por %p39, %p40
      %p42 = scmp.ne.s32.totalorder %s33, %s34
      %p43 = scmp.eq.s32.totalorder %s28, 0
      %p44 = por %p42, %p43
      %p45 = scmp.ne.s32.totalorder %s33, %s34
      %p46 = scmp.eq.s32.totalorder %s29, 2
      %p47 = por %p45, %p46
      %p49 = scmp.ne.s32.totalorder %s34, %s48
      %p50 = scmp.eq.s32.totalorder %s29, 0
      %p51 = por %p49, %p50
      %s53 = sadd.s32 %s52, 1
      %p56 = scmp.eq.s32.totalorder %s23, 2
      %p57 = scmp.ne.s32.totalorder %s52, %s54
      %p58 = scmp.eq.s32.totalorder %s23, 0
      %p59 = por %p57, %p58
      %p60 = scmp.ne.s32.totalorder %s52, %s54
      %p61 = scmp.eq.s32.totalorder %s28, 2
      %p62 = por %p60, %p61
      %p63 = scmp.ne.s32.totalorder %s54, %s55
      %p64 = scmp.eq.s32.totalorder %s28, 0
      %p65 = por %p63, %p64
      %p66 = scmp.ne.s32.totalorder %s54, %s55
      %p67 = scmp.eq.s32.totalorder %s29, 2
      %p68 = por %p66, %p67
      %p70 = scmp.ne.s32.totalorder %s55, %s69
      %p71 = scmp.eq.s32.totalorder %s29, 0
      %p72 = por %p70, %p71
      %s74 = sadd.s32 %s73, 1
      %p77 = scmp.eq.s32.totalorder %s23, 2
      %p78 = scmp.ne.s32.totalorder %s73, %s75
      %p79 = scmp.eq.s32.totalorder %s23, 0
      %p80 = por %p78, %p79
      %p81 = scmp.ne.s32.totalorder %s73, %s75
      %p82 = scmp.eq.s32.totalorder %s28, 2
      %p83 = por %p81, %p82
      %p84 = scmp.ne.s32.totalorder %s75, %s76
      %p85 = scmp.eq.s32.totalorder %s28, 0
      %p86 = por %p84, %p85
      %p87 = scmp.ne.s32.totalorder %s75, %s76
      %p88 = scmp.eq.s32.totalorder %s29, 2
      %p89 = por %p87, %p88
      %p91 = scmp.ne.s32.totalorder %s76, %s90
      %p92 = scmp.eq.s32.totalorder %s29, 0
      %p93 = por %p91, %p92
      %s95 = sadd.s32 %s94, 1
      %p98 = scmp.eq.s32.totalorder %s23, 2
      %p99 = scmp.ne.s32.totalorder %s94, %s96
      %p100 = scmp.eq.s32.totalorder %s23, 0
      %p101 = por %p99, %p100
      %p102 = scmp.ne.s32.totalorder %s94, %s96
      %p103 = scmp.eq.s32.totalorder %s28, 2
      %p104 = por %p102, %p103
      %p105 = scmp.ne.s32.totalorder %s96, %s97
      %p106 = scmp.eq.s32.totalorder %s28, 0
      %p107 = por %p105, %p106
      %p108 = scmp.ne.s32.totalorder %s96, %s97
      %p109 = scmp.eq.s32.totalorder %s29, 2
      %p110 = por %p108, %p109
      %p112 = scmp.ne.s32.totalorder %s97, %s111
      %p113 = scmp.eq.s32.totalorder %s29, 0
      %p114 = por %p112, %p113
      %s116 = sadd.s32 %s115, 1
      %p119 = scmp.eq.s32.totalorder %s23, 2
      %p120 = scmp.ne.s32.totalorder %s115, %s117
      %p121 = scmp.eq.s32.totalorder %s23, 0
      %p122 = por %p120, %p121
      %p123 = scmp.ne.s32.totalorder %s115, %s117
      %p124 = scmp.eq.s32.totalorder %s28, 2
      %p125 = por %p123, %p124
      %p126 = scmp.ne.s32.totalorder %s117, %s118
      %p127 = scmp.eq.s32.totalorder %s28, 0
      %p128 = por %p126, %p127
      %p129 = scmp.ne.s32.totalorder %s117, %s118
      %p130 = scmp.eq.s32.totalorder %s29, 2
      %p131 = por %p129, %p130
      %p133 = scmp.ne.s32.totalorder %s118, %s132
      %p134 = scmp.eq.s32.totalorder %s29, 0
      %p135 = por %p133, %p134
      %s137 = sadd.s32 %s136, 1
      %p140 = scmp.eq.s32.totalorder %s23, 2
      %p141 = scmp.ne.s32.totalorder %s136, %s138
      %p142 = scmp.eq.s32.totalorder %s23, 0
      %p143 = por %p141, %p142
      %p144 = scmp.ne.s32.totalorder %s136, %s138
      %p145 = scmp.eq.s32.totalorder %s28, 2
      %p146 = por %p144, %p145
      %p147 = scmp.ne.s32.totalorder %s138, %s139
      %p148 = scmp.eq.s32.totalorder %s28, 0
      %p149 = por %p147, %p148
      %p150 = scmp.ne.s32.totalorder %s138, %s139
      %p151 = scmp.eq.s32.totalorder %s29, 2
      %p152 = por %p150, %p151
      %p154 = scmp.ne.s32.totalorder %s139, %s153
      %p155 = scmp.eq.s32.totalorder %s29, 0
      %p156 = por %p154, %p155
      %s158 = sadd.s32 %s157, 1
      %p161 = scmp.eq.s32.totalorder %s23, 2
      %p162 = scmp.ne.s32.totalorder %s157, %s159
      %p163 = scmp.eq.s32.totalorder %s23, 0
      %p164 = por %p162, %p163
      %p165 = scmp.ne.s32.totalorder %s157, %s159
      %p166 = scmp.eq.s32.totalorder %s28, 2
      %p167 = por %p165, %p166
      %p168 = scmp.ne.s32.totalorder %s159, %s160
      %p169 = scmp.eq.s32.totalorder %s28, 0
      %p170 = por %p168, %p169
      %p171 = scmp.ne.s32.totalorder %s159, %s160
      %p172 = scmp.eq.s32.totalorder %s29, 2
      %p173 = por %p171, %p172
      %p175 = scmp.ne.s32.totalorder %s160, %s174
      %p176 = scmp.eq.s32.totalorder %s29, 0
      %p177 = por %p175, %p176
      %s179 = sadd.s32 %s178, 1
      %p182 = scmp.eq.s32.totalorder %s23, 2
      %p183 = scmp.ne.s32.totalorder %s178, %s180
      %p184 = scmp.eq.s32.totalorder %s23, 0
      %p185 = por %p183, %p184
      %p186 = scmp.ne.s32.totalorder %s178, %s180
      %p187 = scmp.eq.s32.totalorder %s28, 2
      %p188 = por %p186, %p187
      %p189 = scmp.ne.s32.totalorder %s180, %s181
      %p190 = scmp.eq.s32.totalorder %s28, 0
      %p191 = por %p189, %p190
      %p192 = scmp.ne.s32.totalorder %s180, %s181
      %p193 = scmp.eq.s32.totalorder %s29, 2
      %p194 = por %p192, %p193
      %p196 = scmp.ne.s32.totalorder %s181, %s195
      %p197 = scmp.eq.s32.totalorder %s29, 0
      %p198 = por %p196, %p197
      %s199 = ssub.s32 %s23, %s30
      %p200 = scmp.eq.s32.totalorder %s199, 0
      %s202 = sadd.s32 %s201, 1
      %s203 = scalar_select %p200, %s201, %s202
      %p206 = pneg %p200
      %p207 = scmp.eq.s32.totalorder %s23, 2
      %p208 = por %p206, %p207
      %p209 = scmp.ne.s32.totalorder %s201, %s204
      %p210 = scmp.eq.s32.totalorder %s23, 0
      %p211 = por %p209, %p210
      %p212 = scmp.ne.s32.totalorder %s201, %s204
      %p213 = scmp.eq.s32.totalorder %s28, 2
      %p214 = por %p212, %p213
      %p215 = scmp.ne.s32.totalorder %s204, %s205
      %p216 = scmp.eq.s32.totalorder %s28, 0
      %p217 = por %p215, %p216
      %p218 = scmp.ne.s32.totalorder %s204, %s205
      %p219 = scmp.eq.s32.totalorder %s29, 2
      %p220 = por %p218, %p219
      %p222 = scmp.ne.s32.totalorder %s205, %s221
      %p223 = scmp.eq.s32.totalorder %s29, 0
      %p224 = por %p222, %p223
      %s225 = ssub.s32 %s23, %s30
      %p226 = scmp.eq.s32.totalorder %s225, 0
      %s228 = sadd.s32 %s227, 1
      %s229 = scalar_select %p226, %s227, %s228
      %p232 = pneg %p226
      %p233 = scmp.eq.s32.totalorder %s23, 2
      %p234 = por %p232, %p233
      %p235 = scmp.ne.s32.totalorder %s227, %s230
      %p236 = scmp.eq.s32.totalorder %s23, 0
      %p237 = por %p235, %p236
      %p238 = scmp.ne.s32.totalorder %s227, %s230
      %p239 = scmp.eq.s32.totalorder %s28, 2
      %p240 = por %p238, %p239
      %p241 = scmp.ne.s32.totalorder %s230, %s231
      %p242 = scmp.eq.s32.totalorder %s28, 0
      %p243 = por %p241, %p242
      %p244 = scmp.ne.s32.totalorder %s230, %s231
      %p245 = scmp.eq.s32.totalorder %s29, 2
      %p246 = por %p244, %p245
      %p248 = scmp.ne.s32.totalorder %s231, %s247
      %p249 = scmp.eq.s32.totalorder %s29, 0
      %p250 = por %p248, %p249
      %s251 = ssub.s32 %s23, %s30
      %p252 = scmp.eq.s32.totalorder %s251, 0
      %s254 = sadd.s32 %s253, 1
      %s255 = scalar_select %p252, %s253, %s254
      %p258 = pneg %p252
      %p259 = scmp.eq.s32.totalorder %s23, 2
      %p260 = por %p258, %p259
      %p261 = scmp.ne.s32.totalorder %s253, %s256
      %p262 = scmp.eq.s32.totalorder %s23, 0
      %p263 = por %p261, %p262
      %p264 = scmp.ne.s32.totalorder %s253, %s256
      %p265 = scmp.eq.s32.totalorder %s28, 2
      %p266 = por %p264, %p265
      %p267 = scmp.ne.s32.totalorder %s256, %s257
      %p268 = scmp.eq.s32.totalorder %s28, 0
      %p269 = por %p267, %p268
      %p270 = scmp.ne.s32.totalorder %s256, %s257
      %p271 = scmp.eq.s32.totalorder %s29, 2
      %p272 = por %p270, %p271
      %p274 = scmp.ne.s32.totalorder %s257, %s273
      %p275 = scmp.eq.s32.totalorder %s29, 0
      %p276 = por %p274, %p275
      %s277 = ssub.s32 %s23, %s30
      %p278 = scmp.eq.s32.totalorder %s277, 0
      %s280 = sadd.s32 %s279, 1
      %s281 = scalar_select %p278, %s279, %s280
      %p284 = pneg %p278
      %p285 = scmp.eq.s32.totalorder %s23, 2
      %p286 = por %p284, %p285
      %p287 = scmp.ne.s32.totalorder %s279, %s282
      %p288 = scmp.eq.s32.totalorder %s23, 0
      %p289 = por %p287, %p288
      %p290 = scmp.ne.s32.totalorder %s279, %s282
      %p291 = scmp.eq.s32.totalorder %s28, 2
      %p292 = por %p290, %p291
      %p293 = scmp.ne.s32.totalorder %s282, %s283
      %p294 = scmp.eq.s32.totalorder %s28, 0
      %p295 = por %p293, %p294
      %p296 = scmp.ne.s32.totalorder %s282, %s283
      %p297 = scmp.eq.s32.totalorder %s29, 2
      %p298 = por %p296, %p297
      %p300 = scmp.ne.s32.totalorder %s283, %s299
      %p301 = scmp.eq.s32.totalorder %s29, 0
      %p302 = por %p300, %p301
      %s303 = ssub.s32 %s23, %s30
      %p304 = scmp.eq.s32.totalorder %s303, 0
      %s306 = sadd.s32 %s305, 1
      %s307 = scalar_select %p304, %s305, %s306
      %p310 = pneg %p304
      %p311 = scmp.eq.s32.totalorder %s23, 2
      %p312 = por %p310, %p311
      %p313 = scmp.ne.s32.totalorder %s305, %s308
      %p314 = scmp.eq.s32.totalorder %s23, 0
      %p315 = por %p313, %p314
      %p316 = scmp.ne.s32.totalorder %s305, %s308
      %p317 = scmp.eq.s32.totalorder %s28, 2
      %p318 = por %p316, %p317
      %p319 = scmp.ne.s32.totalorder %s308, %s309
      %p320 = scmp.eq.s32.totalorder %s28, 0
      %p321 = por %p319, %p320
      %p322 = scmp.ne.s32.totalorder %s308, %s309
      %p323 = scmp.eq.s32.totalorder %s29, 2
      %p324 = por %p322, %p323
      %p326 = scmp.ne.s32.totalorder %s309, %s325
      %p327 = scmp.eq.s32.totalorder %s29, 0
      %p328 = por %p326, %p327
      %s329 = ssub.s32 %s23, %s30
      %p330 = scmp.eq.s32.totalorder %s329, 0
      %s332 = sadd.s32 %s331, 1
      %s333 = scalar_select %p330, %s331, %s332
      %p336 = pneg %p330
      %p337 = scmp.eq.s32.totalorder %s23, 2
      %p338 = por %p336, %p337
      %p339 = scmp.ne.s32.totalorder %s331, %s334
      %p340 = scmp.eq.s32.totalorder %s23, 0
      %p341 = por %p339, %p340
      %p342 = scmp.ne.s32.totalorder %s331, %s334
      %p343 = scmp.eq.s32.totalorder %s28, 2
      %p344 = por %p342, %p343
      %p345 = scmp.ne.s32.totalorder %s334, %s335
      %p346 = scmp.eq.s32.totalorder %s28, 0
      %p347 = por %p345, %p346
      %p348 = scmp.ne.s32.totalorder %s334, %s335
      %p349 = scmp.eq.s32.totalorder %s29, 2
      %p350 = por %p348, %p349
      %p352 = scmp.ne.s32.totalorder %s335, %s351
      %p353 = scmp.eq.s32.totalorder %s29, 0
      %p354 = por %p352, %p353
      %s356 = sadd.s32 %s355, 1
      %p359 = scmp.eq.s32.totalorder %s23, 2
      %p360 = scmp.ne.s32.totalorder %s355, %s357
      %p361 = scmp.eq.s32.totalorder %s23, 0
      %p362 = por %p360, %p361
      %p363 = scmp.ne.s32.totalorder %s355, %s357
      %p364 = scmp.eq.s32.totalorder %s28, 2
      %p365 = por %p363, %p364
      %p366 = scmp.ne.s32.totalorder %s357, %s358
      %p367 = scmp.eq.s32.totalorder %s28, 0
      %p368 = por %p366, %p367
      %p369 = scmp.ne.s32.totalorder %s357, %s358
      %p370 = scmp.eq.s32.totalorder %s29, 2
      %p371 = por %p369, %p370
      %p373 = scmp.ne.s32.totalorder %s358, %s372
      %p374 = scmp.eq.s32.totalorder %s29, 0
      %p375 = por %p373, %p374
      %s377 = sadd.s32 %s376, 1
      %p380 = scmp.eq.s32.totalorder %s23, 2
      %p381 = scmp.ne.s32.totalorder %s376, %s378
      %p382 = scmp.eq.s32.totalorder %s23, 0
      %p383 = por %p381, %p382
      %p384 = scmp.ne.s32.totalorder %s376, %s378
      %p385 = scmp.eq.s32.totalorder %s28, 2
      %p386 = por %p384, %p385
      %p387 = scmp.ne.s32.totalorder %s378, %s379
      %p388 = scmp.eq.s32.totalorder %s28, 0
      %p389 = por %p387, %p388
      %p390 = scmp.ne.s32.totalorder %s378, %s379
      %p391 = scmp.eq.s32.totalorder %s29, 2
      %p392 = por %p390, %p391
      %p394 = scmp.ne.s32.totalorder %s379, %s393
      %p395 = scmp.eq.s32.totalorder %s29, 0
      %p396 = por %p394, %p395
      %s398 = sadd.s32 %s397, 1
      %p401 = scmp.eq.s32.totalorder %s23, 2
      %p402 = scmp.ne.s32.totalorder %s397, %s399
      %p403 = scmp.eq.s32.totalorder %s23, 0
      %p404 = por %p402, %p403
      %p405 = scmp.ne.s32.totalorder %s397, %s399
      %p406 = scmp.eq.s32.totalorder %s28, 2
      %p407 = por %p405, %p406
      %p408 = scmp.ne.s32.totalorder %s399, %s400
      %p409 = scmp.eq.s32.totalorder %s28, 0
      %p410 = por %p408, %p409
      %p411 = scmp.ne.s32.totalorder %s399, %s400
      %p412 = scmp.eq.s32.totalorder %s29, 2
      %p413 = por %p411, %p412
      %p415 = scmp.ne.s32.totalorder %s400, %s414
      %p416 = scmp.eq.s32.totalorder %s29, 0
      %p417 = por %p415, %p416
      %p418 = scmp.le.s32.totalorder 1, %s23
      %p419 = scmp.lt.s32.totalorder %s23, 4
      %p420 = pnand %p418, %p419
      %p421 = pneg %p420
      // Predicated region
      $region9: #{deeper_gcn_forward.1} parent=5 // pred_check
        _
      $region10: #{deeper_gcn_forward.1} parent=5 // pred_check_branch
        %423 = sbr.rel (%p420) target = $region12
      $region11: #{deeper_gcn_forward.1} parent=5 // pred_region
        %s424 = ssub.s32 %s23, 1
        // Predicated region
        $region13: #{deeper_gcn_forward.1} parent=11 // pred_check
          %p425 = pneg %p44
        $region14: #{deeper_gcn_forward.1} parent=11 // pred_check_branch
          %427 = sbr.rel (%p425) target = $region16
        $region15: #{deeper_gcn_forward.1} parent=11 // pred_region
          _
        $region16: #{deeper_gcn_forward.1} parent=11 // pred_fallthru
          _
        // Predicated region
        $region17: #{deeper_gcn_forward.1} parent=11 // pred_check
          %p428 = pneg %p65
        $region18: #{deeper_gcn_forward.1} parent=11 // pred_check_branch
          %430 = sbr.rel (%p428) target = $region20
        $region19: #{deeper_gcn_forward.1} parent=11 // pred_region
          _
        $region20: #{deeper_gcn_forward.1} parent=11 // pred_fallthru
          _
        // Predicated region
        $region21: #{deeper_gcn_forward.1} parent=11 // pred_check
          %p431 = pneg %p86
        $region22: #{deeper_gcn_forward.1} parent=11 // pred_check_branch
          %433 = sbr.rel (%p431) target = $region24
        $region23: #{deeper_gcn_forward.1} parent=11 // pred_region
          _
        $region24: #{deeper_gcn_forward.1} parent=11 // pred_fallthru
          _
        // Predicated region
        $region25: #{deeper_gcn_forward.1} parent=11 // pred_check
          %p434 = pneg %p107
        $region26: #{deeper_gcn_forward.1} parent=11 // pred_check_branch
          %436 = sbr.rel (%p434) target = $region28
        $region27: #{deeper_gcn_forward.1} parent=11 // pred_region
          _
        $region28: #{deeper_gcn_forward.1} parent=11 // pred_fallthru
          _
        // Predicated region
        $region29: #{deeper_gcn_forward.1} parent=11 // pred_check
          %p437 = pneg %p128
        $region30: #{deeper_gcn_forward.1} parent=11 // pred_check_branch
          %439 = sbr.rel (%p437) target = $region32
        $region31: #{deeper_gcn_forward.1} parent=11 // pred_region
          _
        $region32: #{deeper_gcn_forward.1} parent=11 // pred_fallthru
          _
        // Predicated region
        $region33: #{deeper_gcn_forward.1} parent=11 // pred_check
          %p440 = pneg %p149
        $region34: #{deeper_gcn_forward.1} parent=11 // pred_check_branch
          %442 = sbr.rel (%p440) target = $region36
        $region35: #{deeper_gcn_forward.1} parent=11 // pred_region
          _
        $region36: #{deeper_gcn_forward.1} parent=11 // pred_fallthru
          _
        // Predicated region
        $region37: #{deeper_gcn_forward.1} parent=11 // pred_check
          %p443 = pneg %p170
        $region38: #{deeper_gcn_forward.1} parent=11 // pred_check_branch
          %445 = sbr.rel (%p443) target = $region40
        $region39: #{deeper_gcn_forward.1} parent=11 // pred_region
          _
        $region40: #{deeper_gcn_forward.1} parent=11 // pred_fallthru
          _
        // Predicated region
        $region41: #{deeper_gcn_forward.1} parent=11 // pred_check
          %p446 = pneg %p191
        $region42: #{deeper_gcn_forward.1} parent=11 // pred_check_branch
          %448 = sbr.rel (%p446) target = $region44
        $region43: #{deeper_gcn_forward.1} parent=11 // pred_region
          _
        $region44: #{deeper_gcn_forward.1} parent=11 // pred_fallthru
          _
        // Predicated region
        $region45: #{deeper_gcn_forward.1} parent=11 // pred_check
          %p449 = pneg %p368
        $region46: #{deeper_gcn_forward.1} parent=11 // pred_check_branch
          %451 = sbr.rel (%p449) target = $region48
        $region47: #{deeper_gcn_forward.1} parent=11 // pred_region
          _
        $region48: #{deeper_gcn_forward.1} parent=11 // pred_fallthru
          _
        // Predicated region
        $region49: #{deeper_gcn_forward.1} parent=11 // pred_check
          %p452 = pneg %p389
        $region50: #{deeper_gcn_forward.1} parent=11 // pred_check_branch
          %454 = sbr.rel (%p452) target = $region52
        $region51: #{deeper_gcn_forward.1} parent=11 // pred_region
          _
        $region52: #{deeper_gcn_forward.1} parent=11 // pred_fallthru
          _
      $region12: #{deeper_gcn_forward.1} parent=5 // pred_fallthru
        _
      %p455 = scmp.lt.s32.totalorder %s23, 3
      // Predicated region
      $region53: #{deeper_gcn_forward.1} parent=5 // pred_check
        %p456 = pneg %p455
      $region54: #{deeper_gcn_forward.1} parent=5 // pred_check_branch
        %458 = sbr.rel (%p456) target = $region56
      $region55: #{deeper_gcn_forward.1} parent=5 // pred_region
        // Predicated region
        $region57: #{deeper_gcn_forward.1} parent=55 // pred_check
          %p459 = pneg %p211
        $region58: #{deeper_gcn_forward.1} parent=55 // pred_check_branch
          %461 = sbr.rel (%p459) target = $region60
        $region59: #{deeper_gcn_forward.1} parent=55 // pred_region
          %p462 = scmp.lt.s32.totalorder %s23, 2
          %s463 = scalar_select %p462, %s23, 2
          %s464 = scalar_lea.vmem %s8, %s463
        $region60: #{deeper_gcn_forward.1} parent=55 // pred_fallthru
          _
        // Predicated region
        $region61: #{deeper_gcn_forward.1} parent=55 // pred_check
          %p465 = pneg %p237
        $region62: #{deeper_gcn_forward.1} parent=55 // pred_check_branch
          %467 = sbr.rel (%p465) target = $region64
        $region63: #{deeper_gcn_forward.1} parent=55 // pred_region
          %p468 = scmp.lt.s32.totalorder %s23, 2
          %s469 = scalar_select %p468, %s23, 2
          %s470 = scalar_lea.vmem %s9, %s469
        $region64: #{deeper_gcn_forward.1} parent=55 // pred_fallthru
          _
        // Predicated region
        $region65: #{deeper_gcn_forward.1} parent=55 // pred_check
          %p471 = pneg %p263
        $region66: #{deeper_gcn_forward.1} parent=55 // pred_check_branch
          %473 = sbr.rel (%p471) target = $region68
        $region67: #{deeper_gcn_forward.1} parent=55 // pred_region
          %p474 = scmp.lt.s32.totalorder %s23, 2
          %s475 = scalar_select %p474, %s23, 2
          %s476 = smul.addr %s475, 16
          %s477 = smul.addr %s476, 8
          %s478 = scalar_lea.vmem %s10, %s477
        $region68: #{deeper_gcn_forward.1} parent=55 // pred_fallthru
          _
        // Predicated region
        $region69: #{deeper_gcn_forward.1} parent=55 // pred_check
          %p479 = pneg %p289
        $region70: #{deeper_gcn_forward.1} parent=55 // pred_check_branch
          %481 = sbr.rel (%p479) target = $region72
        $region71: #{deeper_gcn_forward.1} parent=55 // pred_region
          %p482 = scmp.lt.s32.totalorder %s23, 2
          %s483 = scalar_select %p482, %s23, 2
          %s484 = scalar_lea.vmem %s11, %s483
        $region72: #{deeper_gcn_forward.1} parent=55 // pred_fallthru
          _
        // Predicated region
        $region73: #{deeper_gcn_forward.1} parent=55 // pred_check
          %p485 = pneg %p315
        $region74: #{deeper_gcn_forward.1} parent=55 // pred_check_branch
          %487 = sbr.rel (%p485) target = $region76
        $region75: #{deeper_gcn_forward.1} parent=55 // pred_region
          %p488 = scmp.lt.s32.totalorder %s23, 2
          %s489 = scalar_select %p488, %s23, 2
          %s490 = smul.addr %s489, 16
          %s491 = smul.addr %s490, 8
          %s492 = scalar_lea.vmem %s12, %s491
        $region76: #{deeper_gcn_forward.1} parent=55 // pred_fallthru
          _
        // Predicated region
        $region77: #{deeper_gcn_forward.1} parent=55 // pred_check
          %p493 = pneg %p341
        $region78: #{deeper_gcn_forward.1} parent=55 // pred_check_branch
          %495 = sbr.rel (%p493) target = $region80
        $region79: #{deeper_gcn_forward.1} parent=55 // pred_region
          %p496 = scmp.lt.s32.totalorder %s23, 2
          %s497 = scalar_select %p496, %s23, 2
          %s498 = scalar_lea.vmem %s13, %s497
        $region80: #{deeper_gcn_forward.1} parent=55 // pred_fallthru
          _
      $region56: #{deeper_gcn_forward.1} parent=5 // pred_fallthru
        _
      %p499 = scmp.le.s32.totalorder 1, %s23
      %p500 = scmp.lt.s32.totalorder %s23, 4
      %p501 = pnand %p499, %p500
      %p502 = pneg %p501
      // Predicated region
      $region81: #{deeper_gcn_forward.1} parent=5 // pred_check
        _
      $region82: #{deeper_gcn_forward.1} parent=5 // pred_check_branch
        %504 = sbr.rel (%p501) target = $region84
      $region83: #{deeper_gcn_forward.1} parent=5 // pred_region
        %s505 = ssub.s32 %s23, 1
        %p506 = pneg %p44
        %p507 = pneg %p41
        %p508 = pneg %p65
        %p509 = pneg %p62
        %p510 = pneg %p86
        %p511 = pneg %p83
        %p512 = pneg %p107
        %p513 = pneg %p104
        %p514 = pneg %p128
        %p515 = pneg %p125
        %p516 = pneg %p149
        %p517 = pneg %p146
        %p518 = pneg %p170
        %p519 = pneg %p167
        %p520 = pneg %p191
        %p521 = pneg %p188
        %p522 = scmp.lt.s32.totalorder %s28, 2
        %s523 = scalar_select %p522, %s28, 2
        %s524 = scalar_lea.vmem %s8, %s523
        %p525 = pneg %p217
        %p526 = pneg %p214
        %p527 = scmp.lt.s32.totalorder %s28, 2
        %s528 = scalar_select %p527, %s28, 2
        %s529 = scalar_lea.vmem %s9, %s528
        %p530 = pneg %p243
        %p531 = pneg %p240
        %p532 = scmp.lt.s32.totalorder %s28, 2
        %s533 = scalar_select %p532, %s28, 2
        %s534 = smul.addr %s533, 16
        %s535 = smul.addr %s534, 8
        %s536 = scalar_lea.vmem %s10, %s535
        %p537 = pneg %p269
        %p538 = pneg %p266
        %p539 = scmp.lt.s32.totalorder %s28, 2
        %s540 = scalar_select %p539, %s28, 2
        %s541 = scalar_lea.vmem %s11, %s540
        %p542 = pneg %p295
        %p543 = pneg %p292
        %p544 = scmp.lt.s32.totalorder %s28, 2
        %s545 = scalar_select %p544, %s28, 2
        %s546 = smul.addr %s545, 16
        %s547 = smul.addr %s546, 8
        %s548 = scalar_lea.vmem %s12, %s547
        %p549 = pneg %p321
        %p550 = pneg %p318
        %p551 = scmp.lt.s32.totalorder %s28, 2
        %s552 = scalar_select %p551, %s28, 2
        %s553 = scalar_lea.vmem %s13, %s552
        %p554 = pneg %p347
        %p555 = pneg %p344
        %p556 = pneg %p368
        %p557 = pneg %p365
        %p558 = pneg %p389
        %p559 = pneg %p386
        %p560 = pneg %p410
        %p561 = pneg %p407
        %p562 = scmp.lt.s32.totalorder %s28, 2
        %s563 = scalar_select %p562, %s28, 2
        %s564 = scalar_lea.vmem %s8, %s563
        %p565 = scmp.lt.s32.totalorder %s28, 2
        %s566 = scalar_select %p565, %s28, 2
        %s567 = scalar_lea.vmem %s9, %s566
        %p568 = scmp.lt.s32.totalorder %s28, 2
        %s569 = scalar_select %p568, %s28, 2
        %s570 = smul.addr %s569, 16
        %s571 = smul.addr %s570, 8
        %s572 = scalar_lea.vmem %s10, %s571
        %p573 = scmp.lt.s32.totalorder %s28, 2
        %s574 = scalar_select %p573, %s28, 2
        %s575 = scalar_lea.vmem %s11, %s574
        %p576 = scmp.lt.s32.totalorder %s28, 2
        %s577 = scalar_select %p576, %s28, 2
        %s578 = smul.addr %s577, 16
        %s579 = smul.addr %s578, 8
        %s580 = scalar_lea.vmem %s12, %s579
        %p581 = scmp.lt.s32.totalorder %s28, 2
        %s582 = scalar_select %p581, %s28, 2
        %s583 = scalar_lea.vmem %s13, %s582
        %v584 = vld [vmem:[%s1] sm:$0xf]
        %v585 = vld [vmem:[%s1 + $0x4] sm:$0xf]
        %v586 = vunpack.c.l.bf16 %v584
        %v587 = vunpack.c.l.bf16 %v585
        %v588 = vld [vmem:[%s2] sm:$0xf]
        %v589 = vld [vmem:[%s2 + $0x4] sm:$0xf]
        %v590 = vunpack.c.l.bf16 %v588
        %v591 = vunpack.c.l.bf16 %v589
        %v592 = vld [vmem:[%s3] sm:$0xf]
        %v593 = vunpack.c.l.bf16 %v592
        %p594 = scmp.eq.s32.totalorder %s28, 0
        // Predicated region
        $region85: #{deeper_gcn_forward.1} parent=83 // pred_check
          %p595 = pneg %p594
        $region86: #{deeper_gcn_forward.1} parent=83 // pred_check_branch
          %597 = sbr.rel (%p595) target = $region88
        $region87: #{deeper_gcn_forward.1} parent=83 // pred_region
          %v598 = vld [vmem:[%s0] sm:$0xff]
          %v599 = vld [vmem:[%s0 + $0x8] sm:$0xff]
          %vm600 = vcmask 130048
          %v602 = vsel %vm600, %v593, 0
          %604 = vmatprep.subr.mxu0 0.0
          %605 = vmatpush1.msra.mxu0 %v598
          %606 = vmatprep.subr.mxu0 0.0
          %607 = vmatpush1.msra.mxu0 %v599
          %608 = vmatprep.subr.mxu0 0.0
          %609 = vmatpush1.msra.mxu0 0.0
          %610 = vmatprep.subr.mxu0 0.0
          %611 = vmatpush1.msra.mxu0 0.0
          %612 = vmatprep.subr.mxu0 0.0
          %613 = vmatpush1.msra.mxu0 0.0
          %614 = vmatprep.subr.mxu0 0.0
          %615 = vmatpush1.msra.mxu0 0.0
          %616 = vmatprep.subr.mxu0 0.0
          %617 = vmatpush1.msra.mxu0 0.0
          %618 = vmatprep.subr.mxu0 0.0
          %619 = vmatpush1.msra.mxu0 0.0
          %620 = vmatprep.subr.mxu0 0.0
          %621 = vmatpush1.msra.mxu0 0.0
          %622 = vmatprep.subr.mxu0 0.0
          %623 = vmatpush1.msra.mxu0 0.0
          %624 = vmatprep.subr.mxu0 0.0
          %625 = vmatpush1.msra.mxu0 0.0
          %626 = vmatprep.subr.mxu0 0.0
          %627 = vmatpush1.msra.mxu0 0.0
          %628 = vmatprep.subr.mxu0 0.0
          %629 = vmatpush1.msra.mxu0 0.0
          %630 = vmatprep.subr.mxu0 0.0
          %631 = vmatpush1.msra.mxu0 0.0
          %632 = vmatprep.subr.mxu0 0.0
          %633 = vmatpush1.msra.mxu0 0.0
          %634 = vmatprep.subr.mxu0 0.0
          %635 = vmatpush1.msra.mxu0 0.0
          %636 = vmatprep.subr.mxu0 0.0
          %637 = vmatpush1.msra.mxu0 0.0
          %638 = vmatprep.subr.mxu0 0.0
          %639 = vmatpush1.msra.mxu0 0.0
          %640 = vmatprep.subr.mxu0 0.0
          %641 = vmatpush1.msra.mxu0 0.0
          %642 = vmatprep.subr.mxu0 0.0
          %643 = vmatpush1.msra.mxu0 0.0
          %644 = vmatprep.subr.mxu0 0.0
          %645 = vmatpush1.msra.mxu0 0.0
          %646 = vmatprep.subr.mxu0 0.0
          %647 = vmatpush1.msra.mxu0 0.0
          %648 = vmatprep.subr.mxu0 0.0
          %649 = vmatpush1.msra.mxu0 0.0
          %650 = vmatprep.subr.mxu0 0.0
          %651 = vmatpush1.msra.mxu0 0.0
          %652 = vmatprep.subr.mxu0 0.0
          %653 = vmatpush1.msra.mxu0 0.0
          %654 = vmatprep.subr.mxu0 0.0
          %655 = vmatpush1.msra.mxu0 0.0
          %656 = vmatprep.subr.mxu0 0.0
          %657 = vmatpush1.msra.mxu0 0.0
          %658 = vmatprep.subr.mxu0 0.0
          %659 = vmatpush1.msra.mxu0 0.0
          %660 = vmatprep.subr.mxu0 0.0
          %661 = vmatpush1.msra.mxu0 0.0
          %662 = vmatprep.subr.mxu0 0.0
          %663 = vmatpush1.msra.mxu0 0.0
          %664 = vmatprep.subr.mxu0 0.0
          %665 = vmatpush1.msra.mxu0 0.0
          %666 = vmatprep.subr.mxu0 0.0
          %667 = vmatpush1.msra.mxu0 0.0
          %668 = vmatprep.mubr.f32.mxu0 0.0
          %669 = vmatmul.mubr.f32.gmra.mrb[0].mxu0 %v602
          %v670 = vpop.f32.mrb[0].mxu0
          %v671 = vadd.f32 0.0, %v670
          %v672 = vpop.f32.mrb[0].mxu0
          %673 = vdwg.mxu0
          %v674 = vld [vmem:[%s4] sm:$0xff]
          %v675 = vld [vmem:[%s5] sm:$0x1]
          %v677 = vlaneseq
          %v678 = vshrl.u32 %v677, 7
          %v679 = vsub.s32 0, %v678
          %v680 = vrot.slane %v675, %v679
          %vm682 = vcmask 64512
          %v684 = vsel %vm682, %v671, 0
          %686 = vmatprep.subr.mxu0 0.0
          %687 = vmatpush1.msra.mxu0 %v674
          %688 = vmatprep.subr.mxu0 0.0
          %689 = vmatpush1.msra.mxu0 0.0
          %690 = vmatprep.subr.mxu0 0.0
          %691 = vmatpush1.msra.mxu0 0.0
          %692 = vmatprep.subr.mxu0 0.0
          %693 = vmatpush1.msra.mxu0 0.0
          %694 = vmatprep.subr.mxu0 0.0
          %695 = vmatpush1.msra.mxu0 0.0
          %696 = vmatprep.subr.mxu0 0.0
          %697 = vmatpush1.msra.mxu0 0.0
          %698 = vmatprep.subr.mxu0 0.0
          %699 = vmatpush1.msra.mxu0 0.0
          %700 = vmatprep.subr.mxu0 0.0
          %701 = vmatpush1.msra.mxu0 0.0
          %702 = vmatprep.subr.mxu0 0.0
          %703 = vmatpush1.msra.mxu0 0.0
          %704 = vmatprep.subr.mxu0 0.0
          %705 = vmatpush1.msra.mxu0 0.0
          %706 = vmatprep.subr.mxu0 0.0
          %707 = vmatpush1.msra.mxu0 0.0
          %708 = vmatprep.subr.mxu0 0.0
          %709 = vmatpush1.msra.mxu0 0.0
          %710 = vmatprep.subr.mxu0 0.0
          %711 = vmatpush1.msra.mxu0 0.0
          %712 = vmatprep.subr.mxu0 0.0
          %713 = vmatpush1.msra.mxu0 0.0
          %714 = vmatprep.subr.mxu0 0.0
          %715 = vmatpush1.msra.mxu0 0.0
          %716 = vmatprep.subr.mxu0 0.0
          %717 = vmatpush1.msra.mxu0 0.0
          %718 = vmatprep.subr.mxu0 0.0
          %719 = vmatpush1.msra.mxu0 0.0
          %720 = vmatprep.subr.mxu0 0.0
          %721 = vmatpush1.msra.mxu0 0.0
          %722 = vmatprep.subr.mxu0 0.0
          %723 = vmatpush1.msra.mxu0 0.0
          %724 = vmatprep.subr.mxu0 0.0
          %725 = vmatpush1.msra.mxu0 0.0
          %726 = vmatprep.subr.mxu0 0.0
          %727 = vmatpush1.msra.mxu0 0.0
          %728 = vmatprep.subr.mxu0 0.0
          %729 = vmatpush1.msra.mxu0 0.0
          %730 = vmatprep.subr.mxu0 0.0
          %731 = vmatpush1.msra.mxu0 0.0
          %732 = vmatprep.subr.mxu0 0.0
          %733 = vmatpush1.msra.mxu0 0.0
          %734 = vmatprep.subr.mxu0 0.0
          %735 = vmatpush1.msra.mxu0 0.0
          %736 = vmatprep.subr.mxu0 0.0
          %737 = vmatpush1.msra.mxu0 0.0
          %738 = vmatprep.subr.mxu0 0.0
          %739 = vmatpush1.msra.mxu0 0.0
          %740 = vmatprep.subr.mxu0 0.0
          %741 = vmatpush1.msra.mxu0 0.0
          %742 = vmatprep.subr.mxu0 0.0
          %743 = vmatpush1.msra.mxu0 0.0
          %744 = vmatprep.subr.mxu0 0.0
          %745 = vmatpush1.msra.mxu0 0.0
          %746 = vmatprep.subr.mxu0 0.0
          %747 = vmatpush1.msra.mxu0 0.0
          %748 = vmatprep.subr.mxu0 0.0
          %749 = vmatpush1.msra.mxu0 0.0
          %750 = vmatprep.mubr.f32.mxu0 0.0
          %751 = vmatmul.mubr.f32.gmra.mrb[0].mxu0 %v684
          %v752 = vpop.f32.mrb[0].mxu0
          %v753 = vadd.f32 %v680, %v752
          %v754 = vpop.f32.mrb[0].mxu0
          %755 = vdwg.mxu0
          %756 = vst [vmem:[#allocation2] sm:$0xff] %v753
          %v757 = vld [vmem:[%s6] sm:$0xff]
          %v758 = vld [vmem:[%s7] sm:$0x1]
          %v760 = vlaneseq
          %v761 = vshrl.u32 %v760, 7
          %v762 = vsub.s32 0, %v761
          %v763 = vrot.slane %v758, %v762
          %v766 = vsel %vm682, %v598, 0
          %v769 = vsel %vm682, %v599, 0
          %771 = vmatprep.subr.mxu0 0.0
          %772 = vmatpush1.msra.mxu0 %v757
          %773 = vmatprep.subr.mxu0 0.0
          %774 = vmatpush1.msra.mxu0 0.0
          %775 = vmatprep.subr.mxu0 0.0
          %776 = vmatpush1.msra.mxu0 0.0
          %777 = vmatprep.subr.mxu0 0.0
          %778 = vmatpush1.msra.mxu0 0.0
          %779 = vmatprep.subr.mxu0 0.0
          %780 = vmatpush1.msra.mxu0 0.0
          %781 = vmatprep.subr.mxu0 0.0
          %782 = vmatpush1.msra.mxu0 0.0
          %783 = vmatprep.subr.mxu0 0.0
          %784 = vmatpush1.msra.mxu0 0.0
          %785 = vmatprep.subr.mxu0 0.0
          %786 = vmatpush1.msra.mxu0 0.0
          %787 = vmatprep.subr.mxu0 0.0
          %788 = vmatpush1.msra.mxu0 0.0
          %789 = vmatprep.subr.mxu0 0.0
          %790 = vmatpush1.msra.mxu0 0.0
          %791 = vmatprep.subr.mxu0 0.0
          %792 = vmatpush1.msra.mxu0 0.0
          %793 = vmatprep.subr.mxu0 0.0
          %794 = vmatpush1.msra.mxu0 0.0
          %795 = vmatprep.subr.mxu0 0.0
          %796 = vmatpush1.msra.mxu0 0.0
          %797 = vmatprep.subr.mxu0 0.0
          %798 = vmatpush1.msra.mxu0 0.0
          %799 = vmatprep.subr.mxu0 0.0
          %800 = vmatpush1.msra.mxu0 0.0
          %801 = vmatprep.subr.mxu0 0.0
          %802 = vmatpush1.msra.mxu0 0.0
          %803 = vmatprep.subr.mxu0 0.0
          %804 = vmatpush1.msra.mxu0 0.0
          %805 = vmatprep.subr.mxu0 0.0
          %806 = vmatpush1.msra.mxu0 0.0
          %807 = vmatprep.subr.mxu0 0.0
          %808 = vmatpush1.msra.mxu0 0.0
          %809 = vmatprep.subr.mxu0 0.0
          %810 = vmatpush1.msra.mxu0 0.0
          %811 = vmatprep.subr.mxu0 0.0
          %812 = vmatpush1.msra.mxu0 0.0
          %813 = vmatprep.subr.mxu0 0.0
          %814 = vmatpush1.msra.mxu0 0.0
          %815 = vmatprep.subr.mxu0 0.0
          %816 = vmatpush1.msra.mxu0 0.0
          %817 = vmatprep.subr.mxu0 0.0
          %818 = vmatpush1.msra.mxu0 0.0
          %819 = vmatprep.subr.mxu0 0.0
          %820 = vmatpush1.msra.mxu0 0.0
          %821 = vmatprep.subr.mxu0 0.0
          %822 = vmatpush1.msra.mxu0 0.0
          %823 = vmatprep.subr.mxu0 0.0
          %824 = vmatpush1.msra.mxu0 0.0
          %825 = vmatprep.subr.mxu0 0.0
          %826 = vmatpush1.msra.mxu0 0.0
          %827 = vmatprep.subr.mxu0 0.0
          %828 = vmatpush1.msra.mxu0 0.0
          %829 = vmatprep.subr.mxu0 0.0
          %830 = vmatpush1.msra.mxu0 0.0
          %831 = vmatprep.subr.mxu0 0.0
          %832 = vmatpush1.msra.mxu0 0.0
          %833 = vmatprep.subr.mxu0 0.0
          %834 = vmatpush1.msra.mxu0 0.0
          %835 = vmatprep.mubr.f32.mxu0 0.0
          %836 = vmatmul.mubr.f32.gmra.mrb[0].mxu0 %v766
          %v837 = vpop.f32.mrb[0].mxu0
          %v838 = vadd.f32 %v763, %v837
          %v839 = vpop.f32.mrb[0].mxu0
          %840 = vmatprep.mubr.f32.mxu0 0.0
          %841 = vmatmul.mubr.f32.gmra.mrb[0].mxu0 %v769
          %v842 = vpop.f32.mrb[0].mxu0
          %v843 = vadd.f32 %v763, %v842
          %v844 = vpop.f32.mrb[0].mxu0
          %845 = vdwg.mxu0
          %846 = vst [vmem:[#allocation3] sm:$0xff] %v838
          %847 = vst [vmem:[#allocation3 + $0x8] sm:$0xff] %v843
        $region88: #{deeper_gcn_forward.1} parent=83 // pred_fallthru
          _
        %v848 = vld [vmem:[#allocation2] sm:$0xff]
        %v849 = vrot.slane %v848, 4
        %v850 = vadd.f32 %v848, %v849
        %v851 = vrot.slane %v850, 2
        %v852 = vadd.f32 %v850, %v851
        %v853 = vrot.slane %v852, 1
        %v854 = vadd.f32 %v852, %v853
        %v855 = vrcp.pop 8.0
        %v856 = vmul.f32 %v854, %v855
        %v857 = vsub.f32 %v848, %v856
        %v858 = vmul.f32 %v857, %v857
        %v859 = vrot.slane %v858, 4
        %v860 = vadd.f32 %v858, %v859
        %v861 = vrot.slane %v860, 2
        %v862 = vadd.f32 %v860, %v861
        %v863 = vrot.slane %v862, 1
        %v864 = vadd.f32 %v862, %v863
        %v865 = vmul.f32 %v864, %v855
        %v866 = vadd.f32 %v865, 1e-05
        %v867 = vrsqrt.pop %v866
        %v868 = vmul.f32 %v857, %v867
        %v869 = vld [vmem:[%s564] sm:$0x1]
        %v871 = vlaneseq
        %v872 = vshrl.u32 %v871, 7
        %v873 = vsub.s32 0, %v872
        %v874 = vrot.slane %v869, %v873
        %v876 = vmul.f32 %v868, %v874
        %v877 = vld [vmem:[%s567] sm:$0x1]
        %v879 = vlaneseq
        %v880 = vshrl.u32 %v879, 7
        %v881 = vsub.s32 0, %v880
        %v882 = vrot.slane %v877, %v881
        %v884 = vadd.f32 %v876, %v882
        %v885 = vmax.f32 %v884, 0.0
        %v886 = vld [vmem:[#allocation3] sm:$0xff]
        %v887 = vld [vmem:[#allocation3 + $0x8] sm:$0xff]
        %v888 = vld [vmem:[%s572] sm:$0xff]
        %v889 = vld [vmem:[%s572 + $0x8] sm:$0xff]
        %v890 = vld [vmem:[%s572 + $0x10] sm:$0xff]
        %v891 = vld [vmem:[%s572 + $0x18] sm:$0xff]
        %v892 = vld [vmem:[%s572 + $0x20] sm:$0xff]
        %v893 = vld [vmem:[%s572 + $0x28] sm:$0xff]
        %v894 = vld [vmem:[%s572 + $0x30] sm:$0xff]
        %v895 = vld [vmem:[%s572 + $0x38] sm:$0xff]
        %v896 = vld [vmem:[%s572 + $0x40] sm:$0xff]
        %v897 = vld [vmem:[%s572 + $0x48] sm:$0xff]
        %v898 = vld [vmem:[%s572 + $0x50] sm:$0xff]
        %v899 = vld [vmem:[%s572 + $0x58] sm:$0xff]
        %v900 = vld [vmem:[%s572 + $0x60] sm:$0xff]
        %v901 = vld [vmem:[%s572 + $0x68] sm:$0xff]
        %v902 = vld [vmem:[%s572 + $0x70] sm:$0xff]
        %v903 = vld [vmem:[%s572 + $0x78] sm:$0xff]
        %v904 = vld [vmem:[%s575] sm:$0x1]
        %v906 = vlaneseq
        %v907 = vshrl.u32 %v906, 7
        %v908 = vsub.s32 0, %v907
        %v909 = vrot.slane %v904, %v908
        %911 = vmatprep.subr.mxu0 0.0
        %912 = vmatpush1.msra.mxu0 %v888
        %913 = vmatprep.subr.mxu0 0.0
        %914 = vmatpush1.msra.mxu0 %v889
        %915 = vmatprep.subr.mxu0 0.0
        %916 = vmatpush1.msra.mxu0 %v890
        %917 = vmatprep.subr.mxu0 0.0
        %918 = vmatpush1.msra.mxu0 %v891
        %919 = vmatprep.subr.mxu0 0.0
        %920 = vmatpush1.msra.mxu0 %v892
        %921 = vmatprep.subr.mxu0 0.0
        %922 = vmatpush1.msra.mxu0 %v893
        %923 = vmatprep.subr.mxu0 0.0
        %924 = vmatpush1.msra.mxu0 %v894
        %925 = vmatprep.subr.mxu0 0.0
        %926 = vmatpush1.msra.mxu0 %v895
        %927 = vmatprep.subr.mxu0 0.0
        %928 = vmatpush1.msra.mxu0 %v896
        %929 = vmatprep.subr.mxu0 0.0
        %930 = vmatpush1.msra.mxu0 %v897
        %931 = vmatprep.subr.mxu0 0.0
        %932 = vmatpush1.msra.mxu0 %v898
        %933 = vmatprep.subr.mxu0 0.0
        %934 = vmatpush1.msra.mxu0 %v899
        %935 = vmatprep.subr.mxu0 0.0
        %936 = vmatpush1.msra.mxu0 %v900
        %937 = vmatprep.subr.mxu0 0.0
        %938 = vmatpush1.msra.mxu0 %v901
        %939 = vmatprep.subr.mxu0 0.0
        %940 = vmatpush1.msra.mxu0 %v902
        %941 = vmatprep.subr.mxu0 0.0
        %942 = vmatpush1.msra.mxu0 %v903
        %943 = vmatprep.subr.mxu0 0.0
        %944 = vmatpush1.msra.mxu0 0.0
        %945 = vmatprep.subr.mxu0 0.0
        %946 = vmatpush1.msra.mxu0 0.0
        %947 = vmatprep.subr.mxu0 0.0
        %948 = vmatpush1.msra.mxu0 0.0
        %949 = vmatprep.subr.mxu0 0.0
        %950 = vmatpush1.msra.mxu0 0.0
        %951 = vmatprep.subr.mxu0 0.0
        %952 = vmatpush1.msra.mxu0 0.0
        %953 = vmatprep.subr.mxu0 0.0
        %954 = vmatpush1.msra.mxu0 0.0
        %955 = vmatprep.subr.mxu0 0.0
        %956 = vmatpush1.msra.mxu0 0.0
        %957 = vmatprep.subr.mxu0 0.0
        %958 = vmatpush1.msra.mxu0 0.0
        %959 = vmatprep.subr.mxu0 0.0
        %960 = vmatpush1.msra.mxu0 0.0
        %961 = vmatprep.subr.mxu0 0.0
        %962 = vmatpush1.msra.mxu0 0.0
        %963 = vmatprep.subr.mxu0 0.0
        %964 = vmatpush1.msra.mxu0 0.0
        %965 = vmatprep.subr.mxu0 0.0
        %966 = vmatpush1.msra.mxu0 0.0
        %967 = vmatprep.subr.mxu0 0.0
        %968 = vmatpush1.msra.mxu0 0.0
        %969 = vmatprep.subr.mxu0 0.0
        %970 = vmatpush1.msra.mxu0 0.0
        %971 = vmatprep.subr.mxu0 0.0
        %972 = vmatpush1.msra.mxu0 0.0
        %973 = vmatprep.subr.mxu0 0.0
        %974 = vmatpush1.msra.mxu0 0.0
        %975 = vmatprep.mubr.f32.mxu0 0.0
        %976 = vmatmul.mubr.f32.gmra.mrb[0].mxu0 %v886
        %v977 = vpop.f32.mrb[0].mxu0
        %v978 = vadd.f32 %v909, %v977
        %v979 = vpop.f32.mrb[0].mxu0
        %980 = vmatprep.mubr.f32.mxu0 0.0
        %981 = vmatmul.mubr.f32.gmra.mrb[0].mxu0 %v887
        %v982 = vpop.f32.mrb[0].mxu0
        %v983 = vadd.f32 %v909, %v982
        %v984 = vpop.f32.mrb[0].mxu0
        %985 = vdwg.mxu0
        %vm986 = vcmask 64512
        %v988 = vsel %vm986, %v586, 0
        %v991 = vsel %vm986, %v587, 0
        %993 = vmatprep.subr.mxu0 0.0
        %994 = vmatpush1.msra.mxu0 %v885
        %995 = vmatprep.subr.mxu0 0.0
        %996 = vmatpush1.msra.mxu0 0.0
        %997 = vmatprep.subr.mxu0 0.0
        %998 = vmatpush1.msra.mxu0 0.0
        %999 = vmatprep.subr.mxu0 0.0
        %1000 = vmatpush1.msra.mxu0 0.0
        %1001 = vmatprep.subr.mxu0 0.0
        %1002 = vmatpush1.msra.mxu0 0.0
        %1003 = vmatprep.subr.mxu0 0.0
        %1004 = vmatpush1.msra.mxu0 0.0
        %1005 = vmatprep.subr.mxu0 0.0
        %1006 = vmatpush1.msra.mxu0 0.0
        %1007 = vmatprep.subr.mxu0 0.0
        %1008 = vmatpush1.msra.mxu0 0.0
        %1009 = vmatprep.subr.mxu0 0.0
        %1010 = vmatpush1.msra.mxu0 0.0
        %1011 = vmatprep.subr.mxu0 0.0
        %1012 = vmatpush1.msra.mxu0 0.0
        %1013 = vmatprep.subr.mxu0 0.0
        %1014 = vmatpush1.msra.mxu0 0.0
        %1015 = vmatprep.subr.mxu0 0.0
        %1016 = vmatpush1.msra.mxu0 0.0
        %1017 = vmatprep.subr.mxu0 0.0
        %1018 = vmatpush1.msra.mxu0 0.0
        %1019 = vmatprep.subr.mxu0 0.0
        %1020 = vmatpush1.msra.mxu0 0.0
        %1021 = vmatprep.subr.mxu0 0.0
        %1022 = vmatpush1.msra.mxu0 0.0
        %1023 = vmatprep.subr.mxu0 0.0
        %1024 = vmatpush1.msra.mxu0 0.0
        %1025 = vmatprep.subr.mxu0 0.0
        %1026 = vmatpush1.msra.mxu0 0.0
        %1027 = vmatprep.subr.mxu0 0.0
        %1028 = vmatpush1.msra.mxu0 0.0
        %1029 = vmatprep.subr.mxu0 0.0
        %1030 = vmatpush1.msra.mxu0 0.0
        %1031 = vmatprep.subr.mxu0 0.0
        %1032 = vmatpush1.msra.mxu0 0.0
        %1033 = vmatprep.subr.mxu0 0.0
        %1034 = vmatpush1.msra.mxu0 0.0
        %1035 = vmatprep.subr.mxu0 0.0
        %1036 = vmatpush1.msra.mxu0 0.0
        %1037 = vmatprep.subr.mxu0 0.0
        %1038 = vmatpush1.msra.mxu0 0.0
        %1039 = vmatprep.subr.mxu0 0.0
        %1040 = vmatpush1.msra.mxu0 0.0
        %1041 = vmatprep.subr.mxu0 0.0
        %1042 = vmatpush1.msra.mxu0 0.0
        %1043 = vmatprep.subr.mxu0 0.0
        %1044 = vmatpush1.msra.mxu0 0.0
        %1045 = vmatprep.subr.mxu0 0.0
        %1046 = vmatpush1.msra.mxu0 0.0
        %1047 = vmatprep.subr.mxu0 0.0
        %1048 = vmatpush1.msra.mxu0 0.0
        %1049 = vmatprep.subr.mxu0 0.0
        %1050 = vmatpush1.msra.mxu0 0.0
        %1051 = vmatprep.subr.mxu0 0.0
        %1052 = vmatpush1.msra.mxu0 0.0
        %1053 = vmatprep.subr.mxu0 0.0
        %1054 = vmatpush1.msra.mxu0 0.0
        %1055 = vmatprep.subr.mxu0 0.0
        %1056 = vmatpush1.msra.mxu0 0.0
        %1057 = vmatprep.mubr.f32.mxu0 0.0
        %1058 = vmatmul.mubr.f32.gmra.mrb[0].mxu0 %v988
        %v1059 = vpop.f32.mrb[0].mxu0
        %v1060 = vadd.f32 %v978, %v1059
        %v1061 = vpop.f32.mrb[0].mxu0
        %1062 = vmatprep.mubr.f32.mxu0 0.0
        %1063 = vmatmul.mubr.f32.gmra.mrb[0].mxu0 %v991
        %v1064 = vpop.f32.mrb[0].mxu0
        %v1065 = vadd.f32 %v983, %v1064
        %v1066 = vpop.f32.mrb[0].mxu0
        %1067 = vdwg.mxu0
        %v1068 = vmax.f32 %v1060, 0.0
        %v1069 = vmax.f32 %v1065, 0.0
        %v1070 = vadd.f32 %v1068, 1e-07
        %v1071 = vadd.f32 %v1069, 1e-07
        %v1072 = vmax.f32 %v1070, %v1071
        %v1073 = vrot.slane %v1072, 4
        %v1074 = vmax.f32 %v1072, %v1073
        %v1075 = vrot.slane %v1074, 2
        %v1076 = vmax.f32 %v1074, %v1075
        %v1077 = vrot.slane %v1076, 1
        %v1078 = vmax.f32 %v1076, %v1077
        %v1079 = vsub.f32 %v1070, %v1078
        %v1080 = vsub.f32 %v1071, %v1078
        %v1081 = vmul.f32 %v1079, 1.442695
        %v1082 = vpow.pop %v1081
        %v1083 = vmul.f32 %v1080, 1.442695
        %v1084 = vpow.pop %v1083
        %vm1085 = vcmask 130048
        %v1087 = vsel %vm1085, %v593, 0
        %1089 = vmatprep.subr.mxu0 0.0
        %1090 = vmatpush1.msra.mxu0 %v1082
        %1091 = vmatprep.subr.mxu0 0.0
        %1092 = vmatpush1.msra.mxu0 %v1084
        %1093 = vmatprep.subr.mxu0 0.0
        %1094 = vmatpush1.msra.mxu0 0.0
        %1095 = vmatprep.subr.mxu0 0.0
        %1096 = vmatpush1.msra.mxu0 0.0
        %1097 = vmatprep.subr.mxu0 0.0
        %1098 = vmatpush1.msra.mxu0 0.0
        %1099 = vmatprep.subr.mxu0 0.0
        %1100 = vmatpush1.msra.mxu0 0.0
        %1101 = vmatprep.subr.mxu0 0.0
        %1102 = vmatpush1.msra.mxu0 0.0
        %1103 = vmatprep.subr.mxu0 0.0
        %1104 = vmatpush1.msra.mxu0 0.0
        %1105 = vmatprep.subr.mxu0 0.0
        %1106 = vmatpush1.msra.mxu0 0.0
        %1107 = vmatprep.subr.mxu0 0.0
        %1108 = vmatpush1.msra.mxu0 0.0
        %1109 = vmatprep.subr.mxu0 0.0
        %1110 = vmatpush1.msra.mxu0 0.0
        %1111 = vmatprep.subr.mxu0 0.0
        %1112 = vmatpush1.msra.mxu0 0.0
        %1113 = vmatprep.subr.mxu0 0.0
        %1114 = vmatpush1.msra.mxu0 0.0
        %1115 = vmatprep.subr.mxu0 0.0
        %1116 = vmatpush1.msra.mxu0 0.0
        %1117 = vmatprep.subr.mxu0 0.0
        %1118 = vmatpush1.msra.mxu0 0.0
        %1119 = vmatprep.subr.mxu0 0.0
        %1120 = vmatpush1.msra.mxu0 0.0
        %1121 = vmatprep.subr.mxu0 0.0
        %1122 = vmatpush1.msra.mxu0 0.0
        %1123 = vmatprep.subr.mxu0 0.0
        %1124 = vmatpush1.msra.mxu0 0.0
        %1125 = vmatprep.subr.mxu0 0.0
        %1126 = vmatpush1.msra.mxu0 0.0
        %1127 = vmatprep.subr.mxu0 0.0
        %1128 = vmatpush1.msra.mxu0 0.0
        %1129 = vmatprep.subr.mxu0 0.0
        %1130 = vmatpush1.msra.mxu0 0.0
        %1131 = vmatprep.subr.mxu0 0.0
        %1132 = vmatpush1.msra.mxu0 0.0
        %1133 = vmatprep.subr.mxu0 0.0
        %1134 = vmatpush1.msra.mxu0 0.0
        %1135 = vmatprep.subr.mxu0 0.0
        %1136 = vmatpush1.msra.mxu0 0.0
        %1137 = vmatprep.subr.mxu0 0.0
        %1138 = vmatpush1.msra.mxu0 0.0
        %1139 = vmatprep.subr.mxu0 0.0
        %1140 = vmatpush1.msra.mxu0 0.0
        %1141 = vmatprep.subr.mxu0 0.0
        %1142 = vmatpush1.msra.mxu0 0.0
        %1143 = vmatprep.subr.mxu0 0.0
        %1144 = vmatpush1.msra.mxu0 0.0
        %1145 = vmatprep.subr.mxu0 0.0
        %1146 = vmatpush1.msra.mxu0 0.0
        %1147 = vmatprep.subr.mxu0 0.0
        %1148 = vmatpush1.msra.mxu0 0.0
        %1149 = vmatprep.subr.mxu0 0.0
        %1150 = vmatpush1.msra.mxu0 0.0
        %1151 = vmatprep.subr.mxu0 0.0
        %1152 = vmatpush1.msra.mxu0 0.0
        %1153 = vmatprep.mubr.f32.mxu0 0.0
        %1154 = vmatmul.mubr.f32.gmra.mrb[0].mxu0 %v1087
        %v1155 = vpop.f32.mrb[0].mxu0
        %v1156 = vadd.f32 0.0, %v1155
        %v1157 = vpop.f32.mrb[0].mxu0
        %1158 = vdwg.mxu0
        %v1160 = vsel %vm986, %v590, 0
        %v1163 = vsel %vm986, %v591, 0
        %1165 = vmatprep.subr.mxu0 0.0
        %1166 = vmatpush1.msra.mxu0 %v1156
        %1167 = vmatprep.subr.mxu0 0.0
        %1168 = vmatpush1.msra.mxu0 0.0
        %1169 = vmatprep.subr.mxu0 0.0
        %1170 = vmatpush1.msra.mxu0 0.0
        %1171 = vmatprep.subr.mxu0 0.0
        %1172 = vmatpush1.msra.mxu0 0.0
        %1173 = vmatprep.subr.mxu0 0.0
        %1174 = vmatpush1.msra.mxu0 0.0
        %1175 = vmatprep.subr.mxu0 0.0
        %1176 = vmatpush1.msra.mxu0 0.0
        %1177 = vmatprep.subr.mxu0 0.0
        %1178 = vmatpush1.msra.mxu0 0.0
        %1179 = vmatprep.subr.mxu0 0.0
        %1180 = vmatpush1.msra.mxu0 0.0
        %1181 = vmatprep.subr.mxu0 0.0
        %1182 = vmatpush1.msra.mxu0 0.0
        %1183 = vmatprep.subr.mxu0 0.0
        %1184 = vmatpush1.msra.mxu0 0.0
        %1185 = vmatprep.subr.mxu0 0.0
        %1186 = vmatpush1.msra.mxu0 0.0
        %1187 = vmatprep.subr.mxu0 0.0
        %1188 = vmatpush1.msra.mxu0 0.0
        %1189 = vmatprep.subr.mxu0 0.0
        %1190 = vmatpush1.msra.mxu0 0.0
        %1191 = vmatprep.subr.mxu0 0.0
        %1192 = vmatpush1.msra.mxu0 0.0
        %1193 = vmatprep.subr.mxu0 0.0
        %1194 = vmatpush1.msra.mxu0 0.0
        %1195 = vmatprep.subr.mxu0 0.0
        %1196 = vmatpush1.msra.mxu0 0.0
        %1197 = vmatprep.subr.mxu0 0.0
        %1198 = vmatpush1.msra.mxu0 0.0
        %1199 = vmatprep.subr.mxu0 0.0
        %1200 = vmatpush1.msra.mxu0 0.0
        %1201 = vmatprep.subr.mxu0 0.0
        %1202 = vmatpush1.msra.mxu0 0.0
        %1203 = vmatprep.subr.mxu0 0.0
        %1204 = vmatpush1.msra.mxu0 0.0
        %1205 = vmatprep.subr.mxu0 0.0
        %1206 = vmatpush1.msra.mxu0 0.0
        %1207 = vmatprep.subr.mxu0 0.0
        %1208 = vmatpush1.msra.mxu0 0.0
        %1209 = vmatprep.subr.mxu0 0.0
        %1210 = vmatpush1.msra.mxu0 0.0
        %1211 = vmatprep.subr.mxu0 0.0
        %1212 = vmatpush1.msra.mxu0 0.0
        %1213 = vmatprep.subr.mxu0 0.0
        %1214 = vmatpush1.msra.mxu0 0.0
        %1215 = vmatprep.subr.mxu0 0.0
        %1216 = vmatpush1.msra.mxu0 0.0
        %1217 = vmatprep.subr.mxu0 0.0
        %1218 = vmatpush1.msra.mxu0 0.0
        %1219 = vmatprep.subr.mxu0 0.0
        %1220 = vmatpush1.msra.mxu0 0.0
        %1221 = vmatprep.subr.mxu0 0.0
        %1222 = vmatpush1.msra.mxu0 0.0
        %1223 = vmatprep.subr.mxu0 0.0
        %1224 = vmatpush1.msra.mxu0 0.0
        %1225 = vmatprep.subr.mxu0 0.0
        %1226 = vmatpush1.msra.mxu0 0.0
        %1227 = vmatprep.subr.mxu0 0.0
        %1228 = vmatpush1.msra.mxu0 0.0
        %1229 = vmatprep.mubr.f32.mxu0 0.0
        %1230 = vmatmul.mubr.f32.gmra.mrb[0].mxu0 %v1160
        %v1231 = vpop.f32.mrb[0].mxu0
        %v1232 = vadd.f32 0.0, %v1231
        %v1233 = vpop.f32.mrb[0].mxu0
        %1234 = vmatprep.mubr.f32.mxu0 0.0
        %1235 = vmatmul.mubr.f32.gmra.mrb[0].mxu0 %v1163
        %v1236 = vpop.f32.mrb[0].mxu0
        %v1237 = vadd.f32 0.0, %v1236
        %v1238 = vpop.f32.mrb[0].mxu0
        %1239 = vdwg.mxu0
        %v1240 = vrcp.pop %v1232
        %v1241 = vrcp.pop %v1237
        %v1242 = vmul.f32 %v1082, %v1240
        %v1243 = vmul.f32 %v1084, %v1241
        %v1244 = vmul.f32 %v1070, %v1242
        %v1245 = vmul.f32 %v1071, %v1243
        %1246 = vmatprep.subr.mxu0 0.0
        %1247 = vmatpush1.msra.mxu0 %v1244
        %1248 = vmatprep.subr.mxu0 0.0
        %1249 = vmatpush1.msra.mxu0 %v1245
        %1250 = vmatprep.subr.mxu0 0.0
        %1251 = vmatpush1.msra.mxu0 0.0
        %1252 = vmatprep.subr.mxu0 0.0
        %1253 = vmatpush1.msra.mxu0 0.0
        %1254 = vmatprep.subr.mxu0 0.0
        %1255 = vmatpush1.msra.mxu0 0.0
        %1256 = vmatprep.subr.mxu0 0.0
        %1257 = vmatpush1.msra.mxu0 0.0
        %1258 = vmatprep.subr.mxu0 0.0
        %1259 = vmatpush1.msra.mxu0 0.0
        %1260 = vmatprep.subr.mxu0 0.0
        %1261 = vmatpush1.msra.mxu0 0.0
        %1262 = vmatprep.subr.mxu0 0.0
        %1263 = vmatpush1.msra.mxu0 0.0
        %1264 = vmatprep.subr.mxu0 0.0
        %1265 = vmatpush1.msra.mxu0 0.0
        %1266 = vmatprep.subr.mxu0 0.0
        %1267 = vmatpush1.msra.mxu0 0.0
        %1268 = vmatprep.subr.mxu0 0.0
        %1269 = vmatpush1.msra.mxu0 0.0
        %1270 = vmatprep.subr.mxu0 0.0
        %1271 = vmatpush1.msra.mxu0 0.0
        %1272 = vmatprep.subr.mxu0 0.0
        %1273 = vmatpush1.msra.mxu0 0.0
        %1274 = vmatprep.subr.mxu0 0.0
        %1275 = vmatpush1.msra.mxu0 0.0
        %1276 = vmatprep.subr.mxu0 0.0
        %1277 = vmatpush1.msra.mxu0 0.0
        %1278 = vmatprep.subr.mxu0 0.0
        %1279 = vmatpush1.msra.mxu0 0.0
        %1280 = vmatprep.subr.mxu0 0.0
        %1281 = vmatpush1.msra.mxu0 0.0
        %1282 = vmatprep.subr.mxu0 0.0
        %1283 = vmatpush1.msra.mxu0 0.0
        %1284 = vmatprep.subr.mxu0 0.0
        %1285 = vmatpush1.msra.mxu0 0.0
        %1286 = vmatprep.subr.mxu0 0.0
        %1287 = vmatpush1.msra.mxu0 0.0
        %1288 = vmatprep.subr.mxu0 0.0
        %1289 = vmatpush1.msra.mxu0 0.0
        %1290 = vmatprep.subr.mxu0 0.0
        %1291 = vmatpush1.msra.mxu0 0.0
        %1292 = vmatprep.subr.mxu0 0.0
        %1293 = vmatpush1.msra.mxu0 0.0
        %1294 = vmatprep.subr.mxu0 0.0
        %1295 = vmatpush1.msra.mxu0 0.0
        %1296 = vmatprep.subr.mxu0 0.0
        %1297 = vmatpush1.msra.mxu0 0.0
        %1298 = vmatprep.subr.mxu0 0.0
        %1299 = vmatpush1.msra.mxu0 0.0
        %1300 = vmatprep.subr.mxu0 0.0
        %1301 = vmatpush1.msra.mxu0 0.0
        %1302 = vmatprep.subr.mxu0 0.0
        %1303 = vmatpush1.msra.mxu0 0.0
        %1304 = vmatprep.subr.mxu0 0.0
        %1305 = vmatpush1.msra.mxu0 0.0
        %1306 = vmatprep.subr.mxu0 0.0
        %1307 = vmatpush1.msra.mxu0 0.0
        %1308 = vmatprep.subr.mxu0 0.0
        %1309 = vmatpush1.msra.mxu0 0.0
        %1310 = vmatprep.mubr.f32.mxu0 0.0
        %1311 = vmatmul.mubr.f32.gmra.mrb[0].mxu0 %v1087
        %v1312 = vpop.f32.mrb[0].mxu0
        %v1313 = vadd.f32 0.0, %v1312
        %v1314 = vpop.f32.mrb[0].mxu0
        %1315 = vdwg.mxu0
        %v1316 = vadd.f32 %v885, %v1313
        %v1317 = vld [vmem:[%s580] sm:$0xff]
        %v1318 = vld [vmem:[%s580 + $0x8] sm:$0xff]
        %v1319 = vld [vmem:[%s580 + $0x10] sm:$0xff]
        %v1320 = vld [vmem:[%s580 + $0x18] sm:$0xff]
        %v1321 = vld [vmem:[%s580 + $0x20] sm:$0xff]
        %v1322 = vld [vmem:[%s580 + $0x28] sm:$0xff]
        %v1323 = vld [vmem:[%s580 + $0x30] sm:$0xff]
        %v1324 = vld [vmem:[%s580 + $0x38] sm:$0xff]
        %v1325 = vld [vmem:[%s580 + $0x40] sm:$0xff]
        %v1326 = vld [vmem:[%s580 + $0x48] sm:$0xff]
        %v1327 = vld [vmem:[%s580 + $0x50] sm:$0xff]
        %v1328 = vld [vmem:[%s580 + $0x58] sm:$0xff]
        %v1329 = vld [vmem:[%s580 + $0x60] sm:$0xff]
        %v1330 = vld [vmem:[%s580 + $0x68] sm:$0xff]
        %v1331 = vld [vmem:[%s580 + $0x70] sm:$0xff]
        %v1332 = vld [vmem:[%s580 + $0x78] sm:$0xff]
        %v1333 = vld [vmem:[%s583] sm:$0x1]
        %v1335 = vlaneseq
        %v1336 = vshrl.u32 %v1335, 7
        %v1337 = vsub.s32 0, %v1336
        %v1338 = vrot.slane %v1333, %v1337
        %1340 = vmatprep.subr.mxu0 0.0
        %1341 = vmatpush1.msra.mxu0 %v1317
        %1342 = vmatprep.subr.mxu0 0.0
        %1343 = vmatpush1.msra.mxu0 %v1318
        %1344 = vmatprep.subr.mxu0 0.0
        %1345 = vmatpush1.msra.mxu0 %v1319
        %1346 = vmatprep.subr.mxu0 0.0
        %1347 = vmatpush1.msra.mxu0 %v1320
        %1348 = vmatprep.subr.mxu0 0.0
        %1349 = vmatpush1.msra.mxu0 %v1321
        %1350 = vmatprep.subr.mxu0 0.0
        %1351 = vmatpush1.msra.mxu0 %v1322
        %1352 = vmatprep.subr.mxu0 0.0
        %1353 = vmatpush1.msra.mxu0 %v1323
        %1354 = vmatprep.subr.mxu0 0.0
        %1355 = vmatpush1.msra.mxu0 %v1324
        %1356 = vmatprep.subr.mxu0 0.0
        %1357 = vmatpush1.msra.mxu0 %v1325
        %1358 = vmatprep.subr.mxu0 0.0
        %1359 = vmatpush1.msra.mxu0 %v1326
        %1360 = vmatprep.subr.mxu0 0.0
        %1361 = vmatpush1.msra.mxu0 %v1327
        %1362 = vmatprep.subr.mxu0 0.0
        %1363 = vmatpush1.msra.mxu0 %v1328
        %1364 = vmatprep.subr.mxu0 0.0
        %1365 = vmatpush1.msra.mxu0 %v1329
        %1366 = vmatprep.subr.mxu0 0.0
        %1367 = vmatpush1.msra.mxu0 %v1330
        %1368 = vmatprep.subr.mxu0 0.0
        %1369 = vmatpush1.msra.mxu0 %v1331
        %1370 = vmatprep.subr.mxu0 0.0
        %1371 = vmatpush1.msra.mxu0 %v1332
        %1372 = vmatprep.subr.mxu0 0.0
        %1373 = vmatpush1.msra.mxu0 0.0
        %1374 = vmatprep.subr.mxu0 0.0
        %1375 = vmatpush1.msra.mxu0 0.0
        %1376 = vmatprep.subr.mxu0 0.0
        %1377 = vmatpush1.msra.mxu0 0.0
        %1378 = vmatprep.subr.mxu0 0.0
        %1379 = vmatpush1.msra.mxu0 0.0
        %1380 = vmatprep.subr.mxu0 0.0
        %1381 = vmatpush1.msra.mxu0 0.0
        %1382 = vmatprep.subr.mxu0 0.0
        %1383 = vmatpush1.msra.mxu0 0.0
        %1384 = vmatprep.subr.mxu0 0.0
        %1385 = vmatpush1.msra.mxu0 0.0
        %1386 = vmatprep.subr.mxu0 0.0
        %1387 = vmatpush1.msra.mxu0 0.0
        %1388 = vmatprep.subr.mxu0 0.0
        %1389 = vmatpush1.msra.mxu0 0.0
        %1390 = vmatprep.subr.mxu0 0.0
        %1391 = vmatpush1.msra.mxu0 0.0
        %1392 = vmatprep.subr.mxu0 0.0
        %1393 = vmatpush1.msra.mxu0 0.0
        %1394 = vmatprep.subr.mxu0 0.0
        %1395 = vmatpush1.msra.mxu0 0.0
        %1396 = vmatprep.subr.mxu0 0.0
        %1397 = vmatpush1.msra.mxu0 0.0
        %1398 = vmatprep.subr.mxu0 0.0
        %1399 = vmatpush1.msra.mxu0 0.0
        %1400 = vmatprep.subr.mxu0 0.0
        %1401 = vmatpush1.msra.mxu0 0.0
        %1402 = vmatprep.subr.mxu0 0.0
        %1403 = vmatpush1.msra.mxu0 0.0
        %1404 = vmatprep.mubr.f32.mxu0 0.0
        %1405 = vmatmul.mubr.f32.gmra.mrb[0].mxu0 %v1316
        %v1406 = vpop.f32.mrb[0].mxu0
        %v1407 = vadd.f32 %v1338, %v1406
        %v1408 = vpop.f32.mrb[0].mxu0
        %1409 = vdwg.mxu0
        %v1410 = vadd.f32 %v1407, %v848
        %1411 = vst [vmem:[#allocation2] sm:$0xff] %v1410
        %p1412 = scmp.eq.s32.totalorder %s28, 2
        // Predicated region
        $region89: #{deeper_gcn_forward.1} parent=83 // pred_check
          %p1413 = pneg %p1412
        $region90: #{deeper_gcn_forward.1} parent=83 // pred_check_branch
          %1415 = sbr.rel (%p1413) target = $region92
        $region91: #{deeper_gcn_forward.1} parent=83 // pred_region
          %v1416 = vrot.slane %v1410, 4
          %v1417 = vadd.f32 %v1410, %v1416
          %v1418 = vrot.slane %v1417, 2
          %v1419 = vadd.f32 %v1417, %v1418
          %v1420 = vrot.slane %v1419, 1
          %v1421 = vadd.f32 %v1419, %v1420
          %v1422 = vmul.f32 %v1421, %v855
          %v1423 = vld [vmem:[%s14] sm:$0xff]
          %v1424 = vld [vmem:[%s14 + $0x8] sm:$0xff]
          %v1425 = vld [vmem:[%s14 + $0x10] sm:$0xff]
          %v1426 = vld [vmem:[%s14 + $0x18] sm:$0xff]
          %v1427 = vld [vmem:[%s14 + $0x20] sm:$0xff]
          %v1428 = vld [vmem:[%s14 + $0x28] sm:$0xff]
          %v1429 = vld [vmem:[%s14 + $0x30] sm:$0xff]
          %v1430 = vld [vmem:[%s14 + $0x38] sm:$0xff]
          %v1431 = vld [vmem:[%s14 + $0x40] sm:$0xff]
          %v1432 = vld [vmem:[%s14 + $0x48] sm:$0xff]
          %v1433 = vld [vmem:[%s14 + $0x50] sm:$0xff]
          %v1434 = vld [vmem:[%s14 + $0x58] sm:$0xff]
          %v1435 = vld [vmem:[%s14 + $0x60] sm:$0xff]
          %v1436 = vld [vmem:[%s14 + $0x68] sm:$0xff]
          %v1437 = vld [vmem:[%s14 + $0x70] sm:$0xff]
          %v1438 = vld [vmem:[%s14 + $0x78] sm:$0xff]
          %v1439 = vld [vmem:[%s15] sm:$0x1]
          %1440 = vmatprep.subr.mxu0 0.0
          %1441 = vmatpush1.msra.mxu0 %v1423
          %1442 = vmatprep.subr.mxu0 0.0
          %1443 = vmatpush1.msra.mxu0 %v1424
          %1444 = vmatprep.subr.mxu0 0.0
          %1445 = vmatpush1.msra.mxu0 %v1425
          %1446 = vmatprep.subr.mxu0 0.0
          %1447 = vmatpush1.msra.mxu0 %v1426
          %1448 = vmatprep.subr.mxu0 0.0
          %1449 = vmatpush1.msra.mxu0 %v1427
          %1450 = vmatprep.subr.mxu0 0.0
          %1451 = vmatpush1.msra.mxu0 %v1428
          %1452 = vmatprep.subr.mxu0 0.0
          %1453 = vmatpush1.msra.mxu0 %v1429
          %1454 = vmatprep.subr.mxu0 0.0
          %1455 = vmatpush1.msra.mxu0 %v1430
          %1456 = vmatprep.subr.mxu0 0.0
          %1457 = vmatpush1.msra.mxu0 %v1431
          %1458 = vmatprep.subr.mxu0 0.0
          %1459 = vmatpush1.msra.mxu0 %v1432
          %1460 = vmatprep.subr.mxu0 0.0
          %1461 = vmatpush1.msra.mxu0 %v1433
          %1462 = vmatprep.subr.mxu0 0.0
          %1463 = vmatpush1.msra.mxu0 %v1434
          %1464 = vmatprep.subr.mxu0 0.0
          %1465 = vmatpush1.msra.mxu0 %v1435
          %1466 = vmatprep.subr.mxu0 0.0
          %1467 = vmatpush1.msra.mxu0 %v1436
          %1468 = vmatprep.subr.mxu0 0.0
          %1469 = vmatpush1.msra.mxu0 %v1437
          %1470 = vmatprep.subr.mxu0 0.0
          %1471 = vmatpush1.msra.mxu0 %v1438
          %1472 = vmatprep.subr.mxu0 0.0
          %1473 = vmatpush1.msra.mxu0 0.0
          %1474 = vmatprep.subr.mxu0 0.0
          %1475 = vmatpush1.msra.mxu0 0.0
          %1476 = vmatprep.subr.mxu0 0.0
          %1477 = vmatpush1.msra.mxu0 0.0
          %1478 = vmatprep.subr.mxu0 0.0
          %1479 = vmatpush1.msra.mxu0 0.0
          %1480 = vmatprep.subr.mxu0 0.0
          %1481 = vmatpush1.msra.mxu0 0.0
          %1482 = vmatprep.subr.mxu0 0.0
          %1483 = vmatpush1.msra.mxu0 0.0
          %1484 = vmatprep.subr.mxu0 0.0
          %1485 = vmatpush1.msra.mxu0 0.0
          %1486 = vmatprep.subr.mxu0 0.0
          %1487 = vmatpush1.msra.mxu0 0.0
          %1488 = vmatprep.subr.mxu0 0.0
          %1489 = vmatpush1.msra.mxu0 0.0
          %1490 = vmatprep.subr.mxu0 0.0
          %1491 = vmatpush1.msra.mxu0 0.0
          %1492 = vmatprep.subr.mxu0 0.0
          %1493 = vmatpush1.msra.mxu0 0.0
          %1494 = vmatprep.subr.mxu0 0.0
          %1495 = vmatpush1.msra.mxu0 0.0
          %1496 = vmatprep.subr.mxu0 0.0
          %1497 = vmatpush1.msra.mxu0 0.0
          %1498 = vmatprep.subr.mxu0 0.0
          %1499 = vmatpush1.msra.mxu0 0.0
          %1500 = vmatprep.subr.mxu0 0.0
          %1501 = vmatpush1.msra.mxu0 0.0
          %1502 = vmatprep.subr.mxu0 0.0
          %1503 = vmatpush1.msra.mxu0 0.0
          %1504 = vmatprep.mubr.f32.mxu0 0.0
          %1505 = vmatmul.mubr.f32.gmra.mrb[0].mxu0 %v1422
          %v1506 = vpop.f32.mrb[0].mxu0
          %v1507 = vadd.f32 %v1439, %v1506
          %v1508 = vpop.f32.mrb[0].mxu0
          %1509 = vdwg.mxu0
          %vm1510 = vcmask 122880
          %1511 = vst.msk [vmem:[#allocation4] sm:$0x1] %vm1510, %v1507
        $region92: #{deeper_gcn_forward.1} parent=83 // pred_fallthru
          _
        // Predicated region
        $region93: #{deeper_gcn_forward.1} parent=83 // pred_check
          %p1512 = pneg %p407
        $region94: #{deeper_gcn_forward.1} parent=83 // pred_check_branch
          %1514 = sbr.rel (%p1512) target = $region96
        $region95: #{deeper_gcn_forward.1} parent=83 // pred_region
          %s1516 = ssub.s32 16, 16
          %1517 = vsyncadd [#allocation5], %s1516
          %s1519 = sshll.u32 [#allocation4], 4
          %s1520 = int_to_ptr.vmem [resolvable:$true] %s1519
          %1522 = dma.vmem_to_hbm [thread:$0]  %s1520, 16, %s16, [#allocation5]
        $region96: #{deeper_gcn_forward.1} parent=83 // pred_fallthru
          _
        // Predicated region
        $region97: #{deeper_gcn_forward.1} parent=83 // pred_check
          %p1523 = pneg %p407
        $region98: #{deeper_gcn_forward.1} parent=83 // pred_check_branch
          %1525 = sbr.rel (%p1523) target = $region100
        $region99: #{deeper_gcn_forward.1} parent=83 // pred_region
          %1526 = dma.done [#allocation5], 16
        $region100: #{deeper_gcn_forward.1} parent=83 // pred_fallthru
          _
      $region84: #{deeper_gcn_forward.1} parent=5 // pred_fallthru
        _
      %p1527 = scmp.le.s32.totalorder 2, %s23
      // Predicated region
      $region101: #{deeper_gcn_forward.1} parent=5 // pred_check
        %p1528 = pneg %p1527
      $region102: #{deeper_gcn_forward.1} parent=5 // pred_check_branch
        %1530 = sbr.rel (%p1528) target = $region104
      $region103: #{deeper_gcn_forward.1} parent=5 // pred_region
        %s1531 = ssub.s32 %s23, 2
      $region104: #{deeper_gcn_forward.1} parent=5 // pred_fallthru
        _
    $region6: #{deeper_gcn_forward.1} parent=1 // loop_footer
      %s27 = sadd.s32 1, %s23
    $region7: #{deeper_gcn_forward.1} parent=1 // loop_footer_branch
      %22 = sbr.rel target = $region3
    $region8: #{deeper_gcn_forward.1} parent=1 // loop_exit
      _
    %1532 = vsyncpa [#allocation5], 1
    %s1533 = scalar_lea.sflag [#allocation5], 1
    %1534 = vsyncpa %s1533, 1

</llo_original>
